<compile_context>
chip_gen: v5e
topology: v5e:2x2
jax: 0.10.0
libtpu: 0.0.40
codegen_flags: <defaults>
</compile_context>

<pallas_src>
import math

import jax
import jax.numpy as jnp
from jax.experimental import pallas as pl
from jax.experimental.pallas import tpu as pltpu

# ---------------- synthetic TransformerConfig ----------------
MODEL_DIM    = 128
NUM_HEADS    = 8
NUM_KV_HEADS = 8                       # repeat_factor == 1 (required by reference code)
HEAD_DIM     = MODEL_DIM // NUM_HEADS  # 16
HD2          = HEAD_DIM // 2           # 8
MULTIPLE_OF  = 128
EPS          = 1e-5                    # config.norm_epsilon
B            = 2
START_POS    = 0
S            = NUM_HEADS - START_POS   # literal broadcasting requires start_pos+S == num_heads
BS           = B * S                   # 16
NROWS        = NUM_HEADS * BS          # 128 head-stacked rows (exactly one f32 tile)
INV_SQRT_HD  = 1.0 / math.sqrt(HEAD_DIM)

def _ffn_hidden(dim):
    h = int(2 * (4 * dim) / 3)
    return MULTIPLE_OF * ((h + MULTIPLE_OF - 1) // MULTIPLE_OF)

HIDDEN = _ffn_hidden(MODEL_DIM)        # 384


# ---------------- fused Pallas kernel ----------------
def fused_block_kernel(x_ref, g1_ref, g2_ref, wqkv_ref,
                       cosq_ref, sinq_ref, cosk_ref, sink_ref,
                       stk_ref, stkT_ref, hsel_ref, tile_ref, gk_ref,
                       sel_score_ref, sel_spread_ref,
                       wo_ref, w13_ref, w2_ref, o_ref):
    x = x_ref[...]                                               # (BS, D)

    # ---- norm1 + fused QKV projection (single MXU call, K=128, N=384).
    #      q/k/v come out in the grouped [even-halves | odd-halves] lane layout. ----
    h1n = g1_ref[...] * x * jax.lax.rsqrt(
        jnp.mean(x * x, axis=-1, keepdims=True) + EPS)
    qkv = jnp.dot(h1n, wqkv_ref[...], preferred_element_type=jnp.float32)
    q = qkv[:, :MODEL_DIM]
    k = qkv[:, MODEL_DIM:2 * MODEL_DIM]
    v = qkv[:, 2 * MODEL_DIM:]

    # ---- rotary: full-width (16,128) VPU ops; roll(64) swaps the even/odd 64-lane
    #      halves (XLU slot); 1/sqrt(HD) is folded into the q tables. ----
    half = MODEL_DIM // 2
    q_r = q * cosq_ref[...] + pltpu.roll(q, half, axis=1) * sinq_ref[...]
    k_r = k * cosk_ref[...] + pltpu.roll(k, half, axis=1) * sink_ref[...]

    # ---- head-stacked attention (literal semantics: query head i == key time index i,
    #      softmax over the kv-head axis).  Rows R = i*BS + (b*S+s) -> 128 sublanes,
    #      so every step below is one full-width op; all shuffles are 0/1 matmuls. ----
    qrep = jnp.dot(stk_ref[...], q_r, preferred_element_type=jnp.float32)    # (128,128) block i = q_r
    qb   = jnp.dot(qrep * hsel_ref[...], tile_ref[...],
                   preferred_element_type=jnp.float32)                       # head-i q tiled over kv blocks
    kb   = jnp.dot(gk_ref[...], k_r, preferred_element_type=jnp.float32)     # k(b, time=i) per row block
    vb   = jnp.dot(gk_ref[...], v,  preferred_element_type=jnp.float32)      # v(b, time=i) per row block

    scores = jnp.dot(qb * kb, sel_score_ref[...],
                     preferred_element_type=jnp.float32)                     # (128, NKV)
    m = jnp.max(scores, axis=-1, keepdims=True)
    e = jnp.exp(scores - m)
    attn = e * pl.reciprocal(jnp.sum(e, axis=-1, keepdims=True), approx=True)
    sv = jnp.dot(attn, sel_spread_ref[...],
                 preferred_element_type=jnp.float32) * vb                    # attn spread * V
    xh = jnp.dot(sv, tile_ref[...],
                 preferred_element_type=jnp.float32) * hsel_ref[...]         # sum over kv heads, per-head slot
    out_attn = jnp.dot(stkT_ref[...], xh,
                       preferred_element_type=jnp.float32)                   # (BS,128) un-stacked, grouped lanes

    # ---- output proj + residual + norm2 + SwiGLU FFN (fused w1||w3) + residual ----
    h1 = x + jnp.dot(out_attn, wo_ref[...], preferred_element_type=jnp.float32)
    n2 = g2_ref[...] * h1 * jax.lax.rsqrt(
        jnp.mean(h1 * h1, axis=-1, keepdims=True) + EPS)
    ug = jnp.dot(n2, w13_ref[...], preferred_element_type=jnp.float32)       # (BS, 2*HIDDEN)
    u, gate = ug[:, :HIDDEN], ug[:, HIDDEN:]
    f = jnp.dot(u * jax.nn.sigmoid(u) * gate, w2_ref[...],
                preferred_element_type=jnp.float32)
    o_ref[...] = h1 + f                                          # lane-dense (16,128) store


# ---------------- one-time parameter / table preparation (hoisted out of hot path) ----------------
def prepare_inputs(params, cos, sin):
    g1, g2, wq, wk, wv, wo, w1, w2, w3 = params
    f32 = jnp.float32

    # grouped lane layout: lane = g*64 + head*8 + j  <->  original column head*16 + 2j + g
    hh = jnp.arange(NUM_HEADS)[:, None] * HEAD_DIM
    jj = jnp.arange(HD2)[None, :]
    perm = jnp.concatenate([(hh + 2 * jj).reshape(-1),
                            (hh + 2 * jj + 1).reshape(-1)])

    wqkv  = jnp.concatenate([wq.T[:, perm], wk.T[:, perm], wv.T[:, perm]], axis=1)  # (D, 3D)
    w13   = jnp.concatenate([w1.T, w3.T], axis=1)                                   # (D, 2*HIDDEN)
    woT_g = wo.T[perm, :]                                                           # rows in grouped order

    # pre-broadcast rope tables in the grouped lane layout, replicated over batch rows.
    cos_row = jnp.tile(cos, (1, 2 * NUM_HEADS))                            # (S, 128)
    sin_row = jnp.concatenate([-jnp.tile(sin, (1, NUM_HEADS)),
                               jnp.tile(sin, (1, NUM_HEADS))], axis=1)     # (S, 128)
    cos_bs = jnp.tile(cos_row, (B, 1))                                     # (BS, 128)
    sin_bs = jnp.tile(sin_row, (B, 1))
    cos_q, sin_q = cos_bs * INV_SQRT_HD, sin_bs * INV_SQRT_HD              # fold 1/sqrt(HD)
    cos_k, sin_k = cos_bs, sin_bs

    # constant 0/1 matrices: all sublane/lane shuffles of the head-stacked attention
    # become MXU matmuls (the MXU is idle at this shape; vector slots are the bottleneck).
    Rr = jnp.arange(NROWS)                     # stacked rows R = i*BS + (b*S + s)
    Ll = jnp.arange(MODEL_DIM)                 # grouped lanes L = g*64 + h*8 + j
    rr = jnp.arange(BS)
    i_R, r_R = Rr // BS, Rr % BS
    b_R = r_R // S
    g_L = Ll // (MODEL_DIM // 2)
    h_L = (Ll % (MODEL_DIM // 2)) // HD2
    j_L = Ll % HD2

    STK  = (r_R[:, None] == rr[None, :]).astype(f32)                       # (128, BS): replicate q rows
    STKT = STK.T                                                           # (BS, 128): sum row blocks
    HSEL = (h_L[None, :] == i_R[:, None]).astype(f32)                      # (128,128): keep head-i lanes
    TILE = ((g_L[:, None] == g_L[None, :]) &
            (j_L[:, None] == j_L[None, :])).astype(f32)                    # (128,128): tile dims over heads
    GK   = ((b_R[:, None] == (rr // S)[None, :]) &
            (i_R[:, None] == (rr % S)[None, :])).astype(f32)               # (128, BS): gather k/v(b, time=i)
    SEL_SCORE  = (h_L[:, None] == jnp.arange(NUM_KV_HEADS)[None, :]).astype(f32)  # (128, NKV)
    SEL_SPREAD = SEL_SCORE.T                                               # (NKV, 128)

    return (g1.reshape(1, -1), g2.reshape(1, -1), wqkv,
            cos_q, sin_q, cos_k, sin_k,
            STK, STKT, HSEL, TILE, GK, SEL_SCORE, SEL_SPREAD,
            woT_g, w13, w2.T)


# ---------------- hot-path wrapper: a single grid-less pallas_call ----------------
# TODO(synk): on v7x, shard a leading grid axis / pl.core_map over the 2 TensorCores and
# add BlockSpec pipelining with per-generation VMEM-sized tiles when scaling past toy shapes.
@jax.jit
def transformer_block(x, prepped):
    x_flat = x.reshape(BS, MODEL_DIM)
    vmem = pl.BlockSpec(memory_space=pltpu.MemorySpace.VMEM)
    out_flat = pl.pallas_call(
        fused_block_kernel,
        out_shape=jax.ShapeDtypeStruct((BS, MODEL_DIM), jnp.float32),
        in_specs=[vmem] * (1 + len(prepped)),
        out_specs=vmem,
    )(x_flat, *prepped)
    return out_flat.reshape(B, S, MODEL_DIM)


# ---------------- params / frequencies ----------------
def init_params(key):
    ks = jax.random.split(key, 7)

    def lin(k, out_d, in_d):
        return jax.random.normal(k, (out_d, in_d), jnp.float32) / math.sqrt(in_d)

    wq = lin(ks[0], NUM_HEADS * HEAD_DIM, MODEL_DIM)
    wk = lin(ks[1], NUM_KV_HEADS * HEAD_DIM, MODEL_DIM)
    wv = lin(ks[2], NUM_KV_HEADS * HEAD_DIM, MODEL_DIM)
    wo = lin(ks[3], MODEL_DIM, NUM_HEADS * HEAD_DIM)
    w1 = lin(ks[4], HIDDEN, MODEL_DIM)
    w2 = lin(ks[5], MODEL_DIM, HIDDEN)
    w3 = lin(ks[6], HIDDEN, MODEL_DIM)
    g1 = jnp.ones((MODEL_DIM,), jnp.float32)   # LayerNorm.scale init = ones
    g2 = jnp.ones((MODEL_DIM,), jnp.float32)
    return (g1, g2, wq, wk, wv, wo, w1, w2, w3)


def rope_tables(seq_len, start_pos, head_dim, theta=10000.0):
    inv = 1.0 / (theta ** (jnp.arange(0, head_dim, 2, dtype=jnp.float32) / head_dim))
    pos = jnp.arange(start_pos, start_pos + seq_len, dtype=jnp.float32)
    ang = pos[:, None] * inv[None, :]
    return jnp.cos(ang), jnp.sin(ang)          # each (S, HD/2); complex freqs = cos + i*sin


# ---------------- pure-JAX reference (literal torch semantics) ----------------
def reference_block(x, params, cos, sin):
    g1, g2, wq, wk, wv, wo, w1, w2, w3 = params

    def rms(v, g):
        return g * v * jax.lax.rsqrt(jnp.mean(v * v, axis=-1, keepdims=True) + EPS)

    def rope(t):
        t2 = t.reshape(t.shape[0], t.shape[1], t.shape[2], HD2, 2)
        te, to = t2[..., 0], t2[..., 1]
        c = cos[None, :, None, :]
        s = sin[None, :, None, :]
        return jnp.stack([te * c - to * s, te * s + to * c], axis=-1).reshape(t.shape)

    h = rms(x, g1)
    q = (h @ wq.T).reshape(B, S, NUM_HEADS, HEAD_DIM)
    k = (h @ wk.T).reshape(B, S, NUM_KV_HEADS, HEAD_DIM)
    v = (h @ wv.T).reshape(B, S, NUM_KV_HEADS, HEAD_DIM)
    q = rope(q)
    k = rope(k)
    # zero cache + start_pos==0: cache read == fresh k/v; repeat_factor==1: expand is identity
    scores = jnp.matmul(jnp.transpose(q, (0, 2, 1, 3)),
                        jnp.transpose(k, (0, 1, 3, 2))) / math.sqrt(HEAD_DIM)
    attn = jax.nn.softmax(scores, axis=-1)
    out = jnp.matmul(attn, v)                                    # (B, T, S, HD)
    out = jnp.transpose(out, (0, 2, 1, 3)).reshape(B, S, NUM_HEADS * HEAD_DIM)
    h1 = x + out @ wo.T
    n2 = rms(h1, g2)
    f = (jax.nn.silu(n2 @ w1.T) * (n2 @ w3.T)) @ w2.T
    return h1 + f


if __name__ == "__main__":
    key = jax.random.PRNGKey(0)
    kx, kp = jax.random.split(key)
    x = jax.random.normal(kx, (B, S, MODEL_DIM), jnp.float32)
    params = init_params(kp)
    cos, sin = rope_tables(S, START_POS, HEAD_DIM)

    prepped = jax.block_until_ready(prepare_inputs(params, cos, sin))  # one-time prep
    out = jax.block_until_ready(transformer_block(x, prepped))

    ref = reference_block(x, params, cos, sin)
    assert out.shape == (B, S, MODEL_DIM)
    if not bool(jnp.allclose(out, ref, atol=5e-3, rtol=5e-3)):
        raise AssertionError(
            f"mismatch vs reference, max abs err = {float(jnp.max(jnp.abs(out - ref)))}")
    print("KERNEL_OK")
</pallas_src>

<mosaic_0001>
module attributes {stable_mosaic.version = 11 : i64} {
  func.func @fused_block_kernel(%arg0: memref<16x128xf32, #tpu.memory_space<vmem>>, %arg1: memref<1x128xf32, #tpu.memory_space<vmem>>, %arg2: memref<1x128xf32, #tpu.memory_space<vmem>>, %arg3: memref<128x384xf32, #tpu.memory_space<vmem>>, %arg4: memref<16x128xf32, #tpu.memory_space<vmem>>, %arg5: memref<16x128xf32, #tpu.memory_space<vmem>>, %arg6: memref<16x128xf32, #tpu.memory_space<vmem>>, %arg7: memref<16x128xf32, #tpu.memory_space<vmem>>, %arg8: memref<128x16xf32, #tpu.memory_space<vmem>>, %arg9: memref<16x128xf32, #tpu.memory_space<vmem>>, %arg10: memref<128x128xf32, #tpu.memory_space<vmem>>, %arg11: memref<128x128xf32, #tpu.memory_space<vmem>>, %arg12: memref<128x16xf32, #tpu.memory_space<vmem>>, %arg13: memref<128x8xf32, #tpu.memory_space<vmem>>, %arg14: memref<8x128xf32, #tpu.memory_space<vmem>>, %arg15: memref<128x128xf32, #tpu.memory_space<vmem>>, %arg16: memref<128x768xf32, #tpu.memory_space<vmem>>, %arg17: memref<384x128xf32, #tpu.memory_space<vmem>>, %arg18: memref<16x128xf32, #tpu.memory_space<vmem>>) attributes {dimension_semantics = [], scalar_prefetch = 0 : i64, scratch_operands = 0 : i64, tpu.core_type = #tpu.core_type<tc>} {
    %c0 = arith.constant 0 : index
    %c0_0 = arith.constant 0 : index
    %0 = vector.load %arg0[%c0, %c0_0] : memref<16x128xf32, #tpu.memory_space<vmem>>, vector<16x128xf32>
    %c0_1 = arith.constant 0 : index
    %c0_2 = arith.constant 0 : index
    %1 = vector.load %arg1[%c0_1, %c0_2] : memref<1x128xf32, #tpu.memory_space<vmem>>, vector<1x128xf32>
    %2 = vector.broadcast %1 : vector<1x128xf32> to vector<16x128xf32>
    %3 = arith.mulf %2, %0 : vector<16x128xf32>
    %4 = arith.mulf %0, %0 : vector<16x128xf32>
    %cst = arith.constant dense<0.000000e+00> : vector<16xf32>
    %5 = vector.multi_reduction <add>, %4, %cst [1] : vector<16x128xf32> to vector<16xf32>
    %6 = vector.shape_cast %5 : vector<16xf32> to vector<16x1xf32>
    %cst_3 = arith.constant 1.280000e+02 : f32
    %7 = vector.broadcast %cst_3 : f32 to vector<16x1xf32>
    %8 = arith.divf %6, %7 : vector<16x1xf32>
    %cst_4 = arith.constant 9.99999974E-6 : f32
    %9 = vector.broadcast %cst_4 : f32 to vector<16x1xf32>
    %10 = arith.addf %8, %9 : vector<16x1xf32>
    %11 = math.rsqrt %10 : vector<16x1xf32>
    %12 = vector.broadcast %11 : vector<16x1xf32> to vector<16x128xf32>
    %13 = arith.mulf %3, %12 : vector<16x128xf32>
    %c0_5 = arith.constant 0 : index
    %c0_6 = arith.constant 0 : index
    %14 = vector.load %arg3[%c0_5, %c0_6] : memref<128x384xf32, #tpu.memory_space<vmem>>, vector<128x384xf32>
    %cst_7 = arith.constant dense<0.000000e+00> : vector<16x384xf32>
    %15 = tpu.matmul %13, %14, %cst_7 {dimension_numbers = #tpu.dot_dimension_numbers<[1], [0], [0], [1], [0, 0, 1, 1], [], []>} : vector<16x128xf32>, vector<128x384xf32>, vector<16x384xf32> -> vector<16x384xf32>
    %16 = vector.extract_strided_slice %15 {offsets = [0, 0], sizes = [16, 128], strides = [1, 1]} : vector<16x384xf32> to vector<16x128xf32>
    %17 = vector.extract_strided_slice %15 {offsets = [0, 128], sizes = [16, 128], strides = [1, 1]} : vector<16x384xf32> to vector<16x128xf32>
    %18 = vector.extract_strided_slice %15 {offsets = [0, 256], sizes = [16, 128], strides = [1, 1]} : vector<16x384xf32> to vector<16x128xf32>
    %c0_8 = arith.constant 0 : index
    %c0_9 = arith.constant 0 : index
    %19 = vector.load %arg4[%c0_8, %c0_9] : memref<16x128xf32, #tpu.memory_space<vmem>>, vector<16x128xf32>
    %20 = arith.mulf %16, %19 : vector<16x128xf32>
    %c64_i32 = arith.constant 64 : i32
    %21 = tpu.dynamic_rotate %16 by %c64_i32 dim 1 : vector<16x128xf32>, i32 -> vector<16x128xf32>
    %c0_10 = arith.constant 0 : index
    %c0_11 = arith.constant 0 : index
    %22 = vector.load %arg5[%c0_10, %c0_11] : memref<16x128xf32, #tpu.memory_space<vmem>>, vector<16x128xf32>
    %23 = arith.mulf %21, %22 : vector<16x128xf32>
    %24 = arith.addf %20, %23 : vector<16x128xf32>
    %c0_12 = arith.constant 0 : index
    %c0_13 = arith.constant 0 : index
    %25 = vector.load %arg6[%c0_12, %c0_13] : memref<16x128xf32, #tpu.memory_space<vmem>>, vector<16x128xf32>
    %26 = arith.mulf %17, %25 : vector<16x128xf32>
    %c64_i32_14 = arith.constant 64 : i32
    %27 = tpu.dynamic_rotate %17 by %c64_i32_14 dim 1 : vector<16x128xf32>, i32 -> vector<16x128xf32>
    %c0_15 = arith.constant 0 : index
    %c0_16 = arith.constant 0 : index
    %28 = vector.load %arg7[%c0_15, %c0_16] : memref<16x128xf32, #tpu.memory_space<vmem>>, vector<16x128xf32>
    %29 = arith.mulf %27, %28 : vector<16x128xf32>
    %30 = arith.addf %26, %29 : vector<16x128xf32>
    %c0_17 = arith.constant 0 : index
    %c0_18 = arith.constant 0 : index
    %31 = vector.load %arg8[%c0_17, %c0_18] : memref<128x16xf32, #tpu.memory_space<vmem>>, vector<128x16xf32>
    %cst_19 = arith.constant dense<0.000000e+00> : vector<128x128xf32>
    %32 = tpu.matmul %31, %24, %cst_19 {dimension_numbers = #tpu.dot_dimension_numbers<[1], [0], [0], [1], [0, 0, 1, 1], [], []>} : vector<128x16xf32>, vector<16x128xf32>, vector<128x128xf32> -> vector<128x128xf32>
    %c0_20 = arith.constant 0 : index
    %c0_21 = arith.constant 0 : index
    %33 = vector.load %arg10[%c0_20, %c0_21] : memref<128x128xf32, #tpu.memory_space<vmem>>, vector<128x128xf32>
    %34 = arith.mulf %32, %33 : vector<128x128xf32>
    %c0_22 = arith.constant 0 : index
    %c0_23 = arith.constant 0 : index
    %35 = vector.load %arg11[%c0_22, %c0_23] : memref<128x128xf32, #tpu.memory_space<vmem>>, vector<128x128xf32>
    %cst_24 = arith.constant dense<0.000000e+00> : vector<128x128xf32>
    %36 = tpu.matmul %34, %35, %cst_24 {dimension_numbers = #tpu.dot_dimension_numbers<[1], [0], [0], [1], [0, 0, 1, 1], [], []>} : vector<128x128xf32>, vector<128x128xf32>, vector<128x128xf32> -> vector<128x128xf32>
    %c0_25 = arith.constant 0 : index
    %c0_26 = arith.constant 0 : index
    %37 = vector.load %arg12[%c0_25, %c0_26] : memref<128x16xf32, #tpu.memory_space<vmem>>, vector<128x16xf32>
    %cst_27 = arith.constant dense<0.000000e+00> : vector<128x128xf32>
    %38 = tpu.matmul %37, %30, %cst_27 {dimension_numbers = #tpu.dot_dimension_numbers<[1], [0], [0], [1], [0, 0, 1, 1], [], []>} : vector<128x16xf32>, vector<16x128xf32>, vector<128x128xf32> -> vector<128x128xf32>
    %c0_28 = arith.constant 0 : index
    %c0_29 = arith.constant 0 : index
    %39 = vector.load %arg12[%c0_28, %c0_29] : memref<128x16xf32, #tpu.memory_space<vmem>>, vector<128x16xf32>
    %cst_30 = arith.constant dense<0.000000e+00> : vector<128x128xf32>
    %40 = tpu.matmul %39, %18, %cst_30 {dimension_numbers = #tpu.dot_dimension_numbers<[1], [0], [0], [1], [0, 0, 1, 1], [], []>} : vector<128x16xf32>, vector<16x128xf32>, vector<128x128xf32> -> vector<128x128xf32>
    %41 = arith.mulf %36, %38 : vector<128x128xf32>
    %c0_31 = arith.constant 0 : index
    %c0_32 = arith.constant 0 : index
    %42 = vector.load %arg13[%c0_31, %c0_32] : memref<128x8xf32, #tpu.memory_space<vmem>>, vector<128x8xf32>
    %cst_33 = arith.constant dense<0.000000e+00> : vector<128x8xf32>
    %43 = tpu.matmul %41, %42, %cst_33 {dimension_numbers = #tpu.dot_dimension_numbers<[1], [0], [0], [1], [0, 0, 1, 1], [], []>} : vector<128x128xf32>, vector<128x8xf32>, vector<128x8xf32> -> vector<128x8xf32>
    %cst_34 = arith.constant dense<0xFF800000> : vector<128xf32>
    %44 = vector.multi_reduction <maximumf>, %43, %cst_34 [1] : vector<128x8xf32> to vector<128xf32>
    %45 = vector.shape_cast %44 : vector<128xf32> to vector<128x1xf32>
    %46 = vector.broadcast %45 : vector<128x1xf32> to vector<128x8xf32>
    %47 = arith.subf %43, %46 : vector<128x8xf32>
    %48 = math.exp %47 : vector<128x8xf32>
    %cst_35 = arith.constant dense<0.000000e+00> : vector<128xf32>
    %49 = vector.multi_reduction <add>, %48, %cst_35 [1] : vector<128x8xf32> to vector<128xf32>
    %50 = vector.shape_cast %49 : vector<128xf32> to vector<128x1xf32>
    %51 = tpu.reciprocal %50 {approx = true} : vector<128x1xf32> -> vector<128x1xf32>
    %52 = vector.broadcast %51 : vector<128x1xf32> to vector<128x8xf32>
    %53 = arith.mulf %48, %52 : vector<128x8xf32>
    %c0_36 = arith.constant 0 : index
    %c0_37 = arith.constant 0 : index
    %54 = vector.load %arg14[%c0_36, %c0_37] : memref<8x128xf32, #tpu.memory_space<vmem>>, vector<8x128xf32>
    %cst_38 = arith.constant dense<0.000000e+00> : vector<128x128xf32>
    %55 = tpu.matmul %53, %54, %cst_38 {dimension_numbers = #tpu.dot_dimension_numbers<[1], [0], [0], [1], [0, 0, 1, 1], [], []>} : vector<128x8xf32>, vector<8x128xf32>, vector<128x128xf32> -> vector<128x128xf32>
    %56 = arith.mulf %55, %40 : vector<128x128xf32>
    %c0_39 = arith.constant 0 : index
    %c0_40 = arith.constant 0 : index
    %57 = vector.load %arg11[%c0_39, %c0_40] : memref<128x128xf32, #tpu.memory_space<vmem>>, vector<128x128xf32>
    %cst_41 = arith.constant dense<0.000000e+00> : vector<128x128xf32>
    %58 = tpu.matmul %56, %57, %cst_41 {dimension_numbers = #tpu.dot_dimension_numbers<[1], [0], [0], [1], [0, 0, 1, 1], [], []>} : vector<128x128xf32>, vector<128x128xf32>, vector<128x128xf32> -> vector<128x128xf32>
    %c0_42 = arith.constant 0 : index
    %c0_43 = arith.constant 0 : index
    %59 = vector.load %arg10[%c0_42, %c0_43] : memref<128x128xf32, #tpu.memory_space<vmem>>, vector<128x128xf32>
    %60 = arith.mulf %58, %59 : vector<128x128xf32>
    %c0_44 = arith.constant 0 : index
    %c0_45 = arith.constant 0 : index
    %61 = vector.load %arg9[%c0_44, %c0_45] : memref<16x128xf32, #tpu.memory_space<vmem>>, vector<16x128xf32>
    %cst_46 = arith.constant dense<0.000000e+00> : vector<16x128xf32>
    %62 = tpu.matmul %61, %60, %cst_46 {dimension_numbers = #tpu.dot_dimension_numbers<[1], [0], [0], [1], [0, 0, 1, 1], [], []>} : vector<16x128xf32>, vector<128x128xf32>, vector<16x128xf32> -> vector<16x128xf32>
    %c0_47 = arith.constant 0 : index
    %c0_48 = arith.constant 0 : index
    %63 = vector.load %arg15[%c0_47, %c0_48] : memref<128x128xf32, #tpu.memory_space<vmem>>, vector<128x128xf32>
    %cst_49 = arith.constant dense<0.000000e+00> : vector<16x128xf32>
    %64 = tpu.matmul %62, %63, %cst_49 {dimension_numbers = #tpu.dot_dimension_numbers<[1], [0], [0], [1], [0, 0, 1, 1], [], []>} : vector<16x128xf32>, vector<128x128xf32>, vector<16x128xf32> -> vector<16x128xf32>
    %65 = arith.addf %0, %64 : vector<16x128xf32>
    %c0_50 = arith.constant 0 : index
    %c0_51 = arith.constant 0 : index
    %66 = vector.load %arg2[%c0_50, %c0_51] : memref<1x128xf32, #tpu.memory_space<vmem>>, vector<1x128xf32>
    %67 = vector.broadcast %66 : vector<1x128xf32> to vector<16x128xf32>
    %68 = arith.mulf %67, %65 : vector<16x128xf32>
    %69 = arith.mulf %65, %65 : vector<16x128xf32>
    %cst_52 = arith.constant dense<0.000000e+00> : vector<16xf32>
    %70 = vector.multi_reduction <add>, %69, %cst_52 [1] : vector<16x128xf32> to vector<16xf32>
    %71 = vector.shape_cast %70 : vector<16xf32> to vector<16x1xf32>
    %cst_53 = arith.constant 1.280000e+02 : f32
    %72 = vector.broadcast %cst_53 : f32 to vector<16x1xf32>
    %73 = arith.divf %71, %72 : vector<16x1xf32>
    %cst_54 = arith.constant 9.99999974E-6 : f32
    %74 = vector.broadcast %cst_54 : f32 to vector<16x1xf32>
    %75 = arith.addf %73, %74 : vector<16x1xf32>
    %76 = math.rsqrt %75 : vector<16x1xf32>
    %77 = vector.broadcast %76 : vector<16x1xf32> to vector<16x128xf32>
    %78 = arith.mulf %68, %77 : vector<16x128xf32>
    %c0_55 = arith.constant 0 : index
    %c0_56 = arith.constant 0 : index
    %79 = vector.load %arg16[%c0_55, %c0_56] : memref<128x768xf32, #tpu.memory_space<vmem>>, vector<128x768xf32>
    %cst_57 = arith.constant dense<0.000000e+00> : vector<16x768xf32>
    %80 = tpu.matmul %78, %79, %cst_57 {dimension_numbers = #tpu.dot_dimension_numbers<[1], [0], [0], [1], [0, 0, 1, 1], [], []>} : vector<16x128xf32>, vector<128x768xf32>, vector<16x768xf32> -> vector<16x768xf32>
    %81 = vector.extract_strided_slice %80 {offsets = [0, 0], sizes = [16, 384], strides = [1, 1]} : vector<16x768xf32> to vector<16x384xf32>
    %82 = vector.extract_strided_slice %80 {offsets = [0, 384], sizes = [16, 384], strides = [1, 1]} : vector<16x768xf32> to vector<16x384xf32>
    %83 = arith.negf %81 : vector<16x384xf32>
    %84 = math.exp %83 : vector<16x384xf32>
    %cst_58 = arith.constant 1.000000e+00 : f32
    %85 = vector.broadcast %cst_58 : f32 to vector<16x384xf32>
    %86 = arith.addf %85, %84 : vector<16x384xf32>
    %87 = arith.divf %85, %86 : vector<16x384xf32>
    %88 = arith.mulf %81, %87 : vector<16x384xf32>
    %89 = arith.mulf %88, %82 : vector<16x384xf32>
    %c0_59 = arith.constant 0 : index
    %c0_60 = arith.constant 0 : index
    %90 = vector.load %arg17[%c0_59, %c0_60] : memref<384x128xf32, #tpu.memory_space<vmem>>, vector<384x128xf32>
    %cst_61 = arith.constant dense<0.000000e+00> : vector<16x128xf32>
    %91 = tpu.matmul %89, %90, %cst_61 {dimension_numbers = #tpu.dot_dimension_numbers<[1], [0], [0], [1], [0, 0, 1, 1], [], []>} : vector<16x384xf32>, vector<384x128xf32>, vector<16x128xf32> -> vector<16x128xf32>
    %92 = arith.addf %65, %91 : vector<16x128xf32>
    %c0_62 = arith.constant 0 : index
    %c0_63 = arith.constant 0 : index
    %93 = vector.load %arg18[%c0_62, %c0_63] : memref<16x128xf32, #tpu.memory_space<vmem>>, vector<16x128xf32>
    tpu.vector_store %arg18[%c0_62, %c0_63], %92 {strides = array<i32>} : memref<16x128xf32, #tpu.memory_space<vmem>>, vector<16x128xf32>,
    return
  }
}

</mosaic_0001>

<llo_original>
// kernel: transformer_block.1
$region0: #{transformer_block.1}
  #allocation0 [shape = 'u32[]', space=smem, size = 0x4, offset = 0x4, fixed_abs, tag = 'smem constant byte address 0x4 - core index']
  #allocation1 [shape = 'u32[72,128]{1,0:T(1,128)}', space=vmem, size = 0x9000, scoped, tag = 'internal scratch']
  %s0 = inlined_call_operand.vmem [shape: f32[16,128], index: 0, kind: input, shape index: {}]
  %s1 = inlined_call_operand.hbm [shape: f32[1,128], index: 1, kind: input, shape index: {}]
  %s2 = inlined_call_operand.hbm [shape: f32[1,128], index: 2, kind: input, shape index: {}]
  %s3 = inlined_call_operand.hbm [shape: f32[128,384], index: 3, kind: input, shape index: {}]
  %s4 = inlined_call_operand.hbm [shape: f32[16,128], index: 4, kind: input, shape index: {}]
  %s5 = inlined_call_operand.hbm [shape: f32[16,128], index: 5, kind: input, shape index: {}]
  %s6 = inlined_call_operand.hbm [shape: f32[16,128], index: 6, kind: input, shape index: {}]
  %s7 = inlined_call_operand.hbm [shape: f32[16,128], index: 7, kind: input, shape index: {}]
  %s8 = inlined_call_operand.vmem [shape: f32[128,16], index: 8, kind: input, shape index: {}]
  %s9 = inlined_call_operand.hbm [shape: f32[16,128], index: 9, kind: input, shape index: {}]
  %s10 = inlined_call_operand.vmem [shape: f32[128,128], index: 10, kind: input, shape index: {}]
  %s11 = inlined_call_operand.vmem [shape: f32[128,128], index: 11, kind: input, shape index: {}]
  %s12 = inlined_call_operand.vmem [shape: f32[128,16], index: 12, kind: input, shape index: {}]
  %s13 = inlined_call_operand.vmem [shape: f32[128,8], index: 13, kind: input, shape index: {}]
  %s14 = inlined_call_operand.vmem [shape: f32[8,128], index: 14, kind: input, shape index: {}]
  %s15 = inlined_call_operand.vmem [shape: f32[128,128], index: 15, kind: input, shape index: {}]
  %s16 = inlined_call_operand.hbm [shape: f32[128,768], index: 16, kind: input, shape index: {}]
  %s17 = inlined_call_operand.hbm [shape: f32[384,128], index: 17, kind: input, shape index: {}]
  %s18 = inlined_call_operand.hbm [shape: f32[16,128], index: 18, kind: output, shape index: {}]
  %s19 = sld [smem:[#allocation0]]
  $region122: #{transformer_block.1} parent=0
    _
  %s21 = ssub.s32 1, %s19
  %s22 = scalar_select 0, %s21, %s19
  $region1: #{transformer_block.1} parent=0
    #allocation2 [shape = 'u8[512]{0}', space=vmem, size = 0x400, scoped, tag = 'input window, operand 1, single buffered']
    #allocation3 [shape = 's32[1]{0}', space=sflag, size = 0x4, scoped, tag = 'scoped memory for transformer_block.1']
    #allocation4 [shape = 's32[1]{0}', space=sflag, size = 0x4, scoped, tag = 'scoped memory for transformer_block.1']
    #allocation5 [shape = 'u8[512]{0}', space=vmem, size = 0x400, scoped, tag = 'input window, operand 2, single buffered']
    #allocation6 [shape = 's32[1]{0}', space=sflag, size = 0x4, scoped, tag = 'scoped memory for transformer_block.1']
    #allocation7 [shape = 'u8[196608]{0}', space=vmem, size = 0x30000, scoped, tag = 'input window, operand 3, single buffered']
    #allocation8 [shape = 'u8[8192]{0}', space=vmem, size = 0x2000, scoped, tag = 'input window, operand 4, single buffered']
    #allocation9 [shape = 's32[1]{0}', space=sflag, size = 0x4, scoped, tag = 'scoped memory for transformer_block.1']
    #allocation10 [shape = 'u8[8192]{0}', space=vmem, size = 0x2000, scoped, tag = 'input window, operand 5, single buffered']
    #allocation11 [shape = 'u8[8192]{0}', space=vmem, size = 0x2000, scoped, tag = 'input window, operand 6, single buffered']
    #allocation12 [shape = 's32[1]{0}', space=sflag, size = 0x4, scoped, tag = 'scoped memory for transformer_block.1']
    #allocation13 [shape = 'u8[8192]{0}', space=vmem, size = 0x2000, scoped, tag = 'input window, operand 7, single buffered']
    #allocation14 [shape = 'u8[8192]{0}', space=vmem, size = 0x2000, scoped, tag = 'input window, operand 9, single buffered']
    #allocation15 [shape = 's32[1]{0}', space=sflag, size = 0x4, scoped, tag = 'scoped memory for transformer_block.1']
    #allocation16 [shape = 'u8[393216]{0}', space=vmem, size = 0x60000, scoped, tag = 'input window, operand 16, single buffered']
    #allocation17 [shape = 'u8[196608]{0}', space=vmem, size = 0x30000, scoped, tag = 'input window, operand 17, single buffered']
    #allocation18 [shape = 's32[1]{0}', space=sflag, size = 0x4, scoped, tag = 'scoped memory for transformer_block.1']
    #allocation19 [shape = 'u8[8192]{0}', space=vmem, size = 0x2000, scoped, tag = 'output window, operand 0, single buffered']
    %23 = vsyncpa [#allocation3], 0
    %24 = vsyncpa [#allocation6], 0
    %25 = vsyncpa [#allocation9], 0
    %26 = vsyncpa [#allocation12], 0
    %27 = vsyncpa [#allocation15], 0
    %28 = vsyncpa [#allocation18], 0
    %29 = vsyncpa [#allocation4], 0
    // Predicated region
    $region2: #{transformer_block.1} parent=1 // pred_check
      _
    $region3: #{transformer_block.1} parent=1 // pred_check_branch
      %31 = sbr.rel (0) target = $region5
    $region4: #{transformer_block.1} parent=1 // pred_region
      _
    $region5: #{transformer_block.1} parent=1 // pred_fallthru
      _
    // Predicated region
    $region6: #{transformer_block.1} parent=1 // pred_check
      _
    $region7: #{transformer_block.1} parent=1 // pred_check_branch
      %33 = sbr.rel (0) target = $region9
    $region8: #{transformer_block.1} parent=1 // pred_region
      %35 = vsyncadd [#allocation3], 0
      %s37 = sshll.u32 %s1, 4
      %s38 = int_to_ptr.hbm [resolvable:$true] %s37
      %s39 = sshll.u32 [#allocation2], 4
      %s40 = int_to_ptr.vmem [resolvable:$true] %s39
      %42 = dma.hbm_to_vmem [thread:$0]  %s38, 16, %s40, [#allocation3]
    $region9: #{transformer_block.1} parent=1 // pred_fallthru
      _
    // Predicated region
    $region10: #{transformer_block.1} parent=1 // pred_check
      _
    $region11: #{transformer_block.1} parent=1 // pred_check_branch
      %44 = sbr.rel (0) target = $region13
    $region12: #{transformer_block.1} parent=1 // pred_region
      %46 = vsyncadd [#allocation6], 0
      %s48 = sshll.u32 %s2, 4
      %s49 = int_to_ptr.hbm [resolvable:$true] %s48
      %s50 = sshll.u32 [#allocation5], 4
      %s51 = int_to_ptr.vmem [resolvable:$true] %s50
      %53 = dma.hbm_to_vmem [thread:$0]  %s49, 16, %s51, [#allocation6]
    $region13: #{transformer_block.1} parent=1 // pred_fallthru
      _
    // Predicated region
    $region14: #{transformer_block.1} parent=1 // pred_check
      _
    $region15: #{transformer_block.1} parent=1 // pred_check_branch
      %55 = sbr.rel (0) target = $region17
    $region16: #{transformer_block.1} parent=1 // pred_region
      %57 = vsyncadd [#allocation6], 0
      %s58 = sshll.u32 %s3, 4
      %s59 = int_to_ptr.hbm [resolvable:$true] %s58
      %s60 = sshll.u32 [#allocation7], 4
      %s61 = int_to_ptr.vmem [resolvable:$true] %s60
      %66 = dma.hbm_to_vmem [thread:$0]  %s59, 6144, %s61, [#allocation6], 384, 384, 24
    $region17: #{transformer_block.1} parent=1 // pred_fallthru
      _
    // Predicated region
    $region18: #{transformer_block.1} parent=1 // pred_check
      _
    $region19: #{transformer_block.1} parent=1 // pred_check_branch
      %68 = sbr.rel (0) target = $region21
    $region20: #{transformer_block.1} parent=1 // pred_region
      %70 = vsyncadd [#allocation9], 0
      %s71 = sshll.u32 %s4, 4
      %s72 = int_to_ptr.hbm [resolvable:$true] %s71
      %s73 = sshll.u32 [#allocation8], 4
      %s74 = int_to_ptr.vmem [resolvable:$true] %s73
      %79 = dma.hbm_to_vmem [thread:$0]  %s72, 256, %s74, [#allocation9], 128, 128, 8
    $region21: #{transformer_block.1} parent=1 // pred_fallthru
      _
    // Predicated region
    $region22: #{transformer_block.1} parent=1 // pred_check
      _
    $region23: #{transformer_block.1} parent=1 // pred_check_branch
      %81 = sbr.rel (0) target = $region25
    $region24: #{transformer_block.1} parent=1 // pred_region
      %83 = vsyncadd [#allocation9], 0
      %s84 = sshll.u32 %s5, 4
      %s85 = int_to_ptr.hbm [resolvable:$true] %s84
      %s86 = sshll.u32 [#allocation10], 4
      %s87 = int_to_ptr.vmem [resolvable:$true] %s86
      %92 = dma.hbm_to_vmem [thread:$0]  %s85, 256, %s87, [#allocation9], 128, 128, 8
    $region25: #{transformer_block.1} parent=1 // pred_fallthru
      _
    // Predicated region
    $region26: #{transformer_block.1} parent=1 // pred_check
      _
    $region27: #{transformer_block.1} parent=1 // pred_check_branch
      %94 = sbr.rel (0) target = $region29
    $region28: #{transformer_block.1} parent=1 // pred_region
      %96 = vsyncadd [#allocation12], 0
      %s97 = sshll.u32 %s6, 4
      %s98 = int_to_ptr.hbm [resolvable:$true] %s97
      %s99 = sshll.u32 [#allocation11], 4
      %s100 = int_to_ptr.vmem [resolvable:$true] %s99
      %105 = dma.hbm_to_vmem [thread:$0]  %s98, 256, %s100, [#allocation12], 128, 128, 8
    $region29: #{transformer_block.1} parent=1 // pred_fallthru
      _
    // Predicated region
    $region30: #{transformer_block.1} parent=1 // pred_check
      _
    $region31: #{transformer_block.1} parent=1 // pred_check_branch
      %107 = sbr.rel (0) target = $region33
    $region32: #{transformer_block.1} parent=1 // pred_region
      %109 = vsyncadd [#allocation12], 0
      %s110 = sshll.u32 %s7, 4
      %s111 = int_to_ptr.hbm [resolvable:$true] %s110
      %s112 = sshll.u32 [#allocation13], 4
      %s113 = int_to_ptr.vmem [resolvable:$true] %s112
      %118 = dma.hbm_to_vmem [thread:$0]  %s111, 256, %s113, [#allocation12], 128, 128, 8
    $region33: #{transformer_block.1} parent=1 // pred_fallthru
      _
    // Predicated region
    $region34: #{transformer_block.1} parent=1 // pred_check
      _
    $region35: #{transformer_block.1} parent=1 // pred_check_branch
      %120 = sbr.rel (0) target = $region37
    $region36: #{transformer_block.1} parent=1 // pred_region
      _
    $region37: #{transformer_block.1} parent=1 // pred_fallthru
      _
    // Predicated region
    $region38: #{transformer_block.1} parent=1 // pred_check
      _
    $region39: #{transformer_block.1} parent=1 // pred_check_branch
      %122 = sbr.rel (0) target = $region41
    $region40: #{transformer_block.1} parent=1 // pred_region
      %124 = vsyncadd [#allocation15], 0
      %s125 = sshll.u32 %s9, 4
      %s126 = int_to_ptr.hbm [resolvable:$true] %s125
      %s127 = sshll.u32 [#allocation14], 4
      %s128 = int_to_ptr.vmem [resolvable:$true] %s127
      %133 = dma.hbm_to_vmem [thread:$0]  %s126, 256, %s128, [#allocation15], 128, 128, 8
    $region41: #{transformer_block.1} parent=1 // pred_fallthru
      _
    // Predicated region
    $region42: #{transformer_block.1} parent=1 // pred_check
      _
    $region43: #{transformer_block.1} parent=1 // pred_check_branch
      %135 = sbr.rel (0) target = $region45
    $region44: #{transformer_block.1} parent=1 // pred_region
      _
    $region45: #{transformer_block.1} parent=1 // pred_fallthru
      _
    // Predicated region
    $region46: #{transformer_block.1} parent=1 // pred_check
      _
    $region47: #{transformer_block.1} parent=1 // pred_check_branch
      %137 = sbr.rel (0) target = $region49
    $region48: #{transformer_block.1} parent=1 // pred_region
      _
    $region49: #{transformer_block.1} parent=1 // pred_fallthru
      _
    // Predicated region
    $region50: #{transformer_block.1} parent=1 // pred_check
      _
    $region51: #{transformer_block.1} parent=1 // pred_check_branch
      %139 = sbr.rel (0) target = $region53
    $region52: #{transformer_block.1} parent=1 // pred_region
      _
    $region53: #{transformer_block.1} parent=1 // pred_fallthru
      _
    // Predicated region
    $region54: #{transformer_block.1} parent=1 // pred_check
      _
    $region55: #{transformer_block.1} parent=1 // pred_check_branch
      %141 = sbr.rel (0) target = $region57
    $region56: #{transformer_block.1} parent=1 // pred_region
      _
    $region57: #{transformer_block.1} parent=1 // pred_fallthru
      _
    // Predicated region
    $region58: #{transformer_block.1} parent=1 // pred_check
      _
    $region59: #{transformer_block.1} parent=1 // pred_check_branch
      %143 = sbr.rel (0) target = $region61
    $region60: #{transformer_block.1} parent=1 // pred_region
      _
    $region61: #{transformer_block.1} parent=1 // pred_fallthru
      _
    // Predicated region
    $region62: #{transformer_block.1} parent=1 // pred_check
      _
    $region63: #{transformer_block.1} parent=1 // pred_check_branch
      %145 = sbr.rel (0) target = $region65
    $region64: #{transformer_block.1} parent=1 // pred_region
      _
    $region65: #{transformer_block.1} parent=1 // pred_fallthru
      _
    // Predicated region
    $region66: #{transformer_block.1} parent=1 // pred_check
      _
    $region67: #{transformer_block.1} parent=1 // pred_check_branch
      %147 = sbr.rel (0) target = $region69
    $region68: #{transformer_block.1} parent=1 // pred_region
      %149 = vsyncadd [#allocation15], 0
      %s150 = sshll.u32 %s16, 4
      %s151 = int_to_ptr.hbm [resolvable:$true] %s150
      %s152 = sshll.u32 [#allocation16], 4
      %s153 = int_to_ptr.vmem [resolvable:$true] %s152
      %158 = dma.hbm_to_vmem [thread:$0]  %s151, 12288, %s153, [#allocation15], 768, 768, 48
    $region69: #{transformer_block.1} parent=1 // pred_fallthru
      _
    // Predicated region
    $region70: #{transformer_block.1} parent=1 // pred_check
      _
    $region71: #{transformer_block.1} parent=1 // pred_check_branch
      %160 = sbr.rel (0) target = $region73
    $region72: #{transformer_block.1} parent=1 // pred_region
      %162 = vsyncadd [#allocation18], 0
      %s163 = sshll.u32 %s17, 4
      %s164 = int_to_ptr.hbm [resolvable:$true] %s163
      %s165 = sshll.u32 [#allocation17], 4
      %s166 = int_to_ptr.vmem [resolvable:$true] %s165
      %171 = dma.hbm_to_vmem [thread:$0]  %s164, 6144, %s166, [#allocation18], 128, 128, 8
    $region73: #{transformer_block.1} parent=1 // pred_fallthru
      _
    // Predicated region
    $region74: #{transformer_block.1} parent=1 // pred_check
      _
    $region75: #{transformer_block.1} parent=1 // pred_check_branch
      %173 = sbr.rel (0) target = $region77
    $region76: #{transformer_block.1} parent=1 // pred_region
      %175 = dma.done [#allocation3], 16
    $region77: #{transformer_block.1} parent=1 // pred_fallthru
      _
    // Predicated region
    $region78: #{transformer_block.1} parent=1 // pred_check
      _
    $region79: #{transformer_block.1} parent=1 // pred_check_branch
      %177 = sbr.rel (0) target = $region81
    $region80: #{transformer_block.1} parent=1 // pred_region
      %179 = dma.done [#allocation6], 16
    $region81: #{transformer_block.1} parent=1 // pred_fallthru
      _
    // Predicated region
    $region82: #{transformer_block.1} parent=1 // pred_check
      _
    $region83: #{transformer_block.1} parent=1 // pred_check_branch
      %181 = sbr.rel (0) target = $region85
    $region84: #{transformer_block.1} parent=1 // pred_region
      %183 = dma.done [#allocation6], 6144
    $region85: #{transformer_block.1} parent=1 // pred_fallthru
      _
    // Predicated region
    $region86: #{transformer_block.1} parent=1 // pred_check
      _
    $region87: #{transformer_block.1} parent=1 // pred_check_branch
      %185 = sbr.rel (0) target = $region89
    $region88: #{transformer_block.1} parent=1 // pred_region
      %187 = dma.done [#allocation9], 256
    $region89: #{transformer_block.1} parent=1 // pred_fallthru
      _
    // Predicated region
    $region90: #{transformer_block.1} parent=1 // pred_check
      _
    $region91: #{transformer_block.1} parent=1 // pred_check_branch
      %189 = sbr.rel (0) target = $region93
    $region92: #{transformer_block.1} parent=1 // pred_region
      %191 = dma.done [#allocation9], 256
    $region93: #{transformer_block.1} parent=1 // pred_fallthru
      _
    // Predicated region
    $region94: #{transformer_block.1} parent=1 // pred_check
      _
    $region95: #{transformer_block.1} parent=1 // pred_check_branch
      %193 = sbr.rel (0) target = $region97
    $region96: #{transformer_block.1} parent=1 // pred_region
      %195 = dma.done [#allocation12], 256
    $region97: #{transformer_block.1} parent=1 // pred_fallthru
      _
    // Predicated region
    $region98: #{transformer_block.1} parent=1 // pred_check
      _
    $region99: #{transformer_block.1} parent=1 // pred_check_branch
      %197 = sbr.rel (0) target = $region101
    $region100: #{transformer_block.1} parent=1 // pred_region
      %199 = dma.done [#allocation12], 256
    $region101: #{transformer_block.1} parent=1 // pred_fallthru
      _
    // Predicated region
    $region102: #{transformer_block.1} parent=1 // pred_check
      _
    $region103: #{transformer_block.1} parent=1 // pred_check_branch
      %201 = sbr.rel (0) target = $region105
    $region104: #{transformer_block.1} parent=1 // pred_region
      %203 = dma.done [#allocation15], 256
    $region105: #{transformer_block.1} parent=1 // pred_fallthru
      _
    // Predicated region
    $region106: #{transformer_block.1} parent=1 // pred_check
      _
    $region107: #{transformer_block.1} parent=1 // pred_check_branch
      %205 = sbr.rel (0) target = $region109
    $region108: #{transformer_block.1} parent=1 // pred_region
      %207 = dma.done [#allocation15], 12288
    $region109: #{transformer_block.1} parent=1 // pred_fallthru
      _
    // Predicated region
    $region110: #{transformer_block.1} parent=1 // pred_check
      _
    $region111: #{transformer_block.1} parent=1 // pred_check_branch
      %209 = sbr.rel (0) target = $region113
    $region112: #{transformer_block.1} parent=1 // pred_region
      %211 = dma.done [#allocation18], 6144
    $region113: #{transformer_block.1} parent=1 // pred_fallthru
      _
    %v212 = vld [vmem:[%s0] sm:$0xff]
    %v213 = vld [vmem:[%s0 + $0x8] sm:$0xff]
    %v214 = vld [vmem:[#allocation2] sm:$0x1]
    %v216 = vperm.slane %v214, 0
    %v218 = vmul.f32 %v216, %v212
    %v219 = vmul.f32 %v216, %v213
    %v220 = vmul.f32 %v212, %v212
    %v221 = vmul.f32 %v213, %v213
    %222 = vadd.xlane.f32.xlu0 %v220
    %v223 = vpop.xlane.xlu0 %222
    %224 = vadd.xlane.f32.xlu0 %v221
    %v225 = vpop.xlane.xlu0 %224
    %v226 = vrcp.pop 128.0
    %v227 = vmul.f32 128.0, %v226
    %v228 = vsub.f32 1.0, %v227
    %v229 = vmul.f32 %v226, %v228
    %v230 = vadd.f32 %v226, %v229
    %vm231 = vweird.f32 %v226
    %v232 = vsel %vm231, %v226, %v230
    %v233 = vmul.f32 %v223, %v232
    %v234 = vmul.f32 %v225, %v232
    %v235 = vadd.f32 %v233, 1e-05
    %v236 = vadd.f32 %v234, 1e-05
    %v237 = vrsqrt.pop %v235
    %v238 = vmul.f32 %v237, %v235
    %v239 = vmul.f32 %v238, %v237
    %v240 = vmul.f32 0.5, %v239
    %v241 = vsub.f32 1.5, %v240
    %v242 = vmul.f32 %v237, %v241
    %vm243 = vweird.f32 %v235
    %vm244 = vweird.f32 %v237
    %vm245 = vmor %vm243, %vm244
    %v246 = vsel %vm245, %v237, %v242
    %v247 = vrsqrt.pop %v236
    %v248 = vmul.f32 %v247, %v236
    %v249 = vmul.f32 %v248, %v247
    %v250 = vmul.f32 0.5, %v249
    %v251 = vsub.f32 1.5, %v250
    %v252 = vmul.f32 %v247, %v251
    %vm253 = vweird.f32 %v236
    %vm254 = vweird.f32 %v247
    %vm255 = vmor %vm253, %vm254
    %v256 = vsel %vm255, %v247, %v252
    %v257 = vmul.f32 %v218, %v246
    %v258 = vmul.f32 %v219, %v256
    %v259 = vld [vmem:[#allocation7] sm:$0xff]
    %v260 = vld [vmem:[#allocation7 + $0x8] sm:$0xff]
    %v261 = vld [vmem:[#allocation7 + $0x10] sm:$0xff]
    %v262 = vld [vmem:[#allocation7 + $0x18] sm:$0xff]
    %v263 = vld [vmem:[#allocation7 + $0x20] sm:$0xff]
    %v264 = vld [vmem:[#allocation7 + $0x28] sm:$0xff]
    %v265 = vld [vmem:[#allocation7 + $0x30] sm:$0xff]
    %v266 = vld [vmem:[#allocation7 + $0x38] sm:$0xff]
    %v267 = vld [vmem:[#allocation7 + $0x40] sm:$0xff]
    %v268 = vld [vmem:[#allocation7 + $0x48] sm:$0xff]
    %v269 = vld [vmem:[#allocation7 + $0x50] sm:$0xff]
    %v270 = vld [vmem:[#allocation7 + $0x58] sm:$0xff]
    %v271 = vld [vmem:[#allocation7 + $0x60] sm:$0xff]
    %v272 = vld [vmem:[#allocation7 + $0x68] sm:$0xff]
    %v273 = vld [vmem:[#allocation7 + $0x70] sm:$0xff]
    %v274 = vld [vmem:[#allocation7 + $0x78] sm:$0xff]
    %v275 = vld [vmem:[#allocation7 + $0x80] sm:$0xff]
    %v276 = vld [vmem:[#allocation7 + $0x88] sm:$0xff]
    %v277 = vld [vmem:[#allocation7 + $0x90] sm:$0xff]
    %v278 = vld [vmem:[#allocation7 + $0x98] sm:$0xff]
    %v279 = vld [vmem:[#allocation7 + $0xa0] sm:$0xff]
    %v280 = vld [vmem:[#allocation7 + $0xa8] sm:$0xff]
    %v281 = vld [vmem:[#allocation7 + $0xb0] sm:$0xff]
    %v282 = vld [vmem:[#allocation7 + $0xb8] sm:$0xff]
    %v283 = vld [vmem:[#allocation7 + $0xc0] sm:$0xff]
    %v284 = vld [vmem:[#allocation7 + $0xc8] sm:$0xff]
    %v285 = vld [vmem:[#allocation7 + $0xd0] sm:$0xff]
    %v286 = vld [vmem:[#allocation7 + $0xd8] sm:$0xff]
    %v287 = vld [vmem:[#allocation7 + $0xe0] sm:$0xff]
    %v288 = vld [vmem:[#allocation7 + $0xe8] sm:$0xff]
    %v289 = vld [vmem:[#allocation7 + $0xf0] sm:$0xff]
    %v290 = vld [vmem:[#allocation7 + $0xf8] sm:$0xff]
    %v291 = vld [vmem:[#allocation7 + $0x100] sm:$0xff]
    %v292 = vld [vmem:[#allocation7 + $0x108] sm:$0xff]
    %v293 = vld [vmem:[#allocation7 + $0x110] sm:$0xff]
    %v294 = vld [vmem:[#allocation7 + $0x118] sm:$0xff]
    %v295 = vld [vmem:[#allocation7 + $0x120] sm:$0xff]
    %v296 = vld [vmem:[#allocation7 + $0x128] sm:$0xff]
    %v297 = vld [vmem:[#allocation7 + $0x130] sm:$0xff]
    %v298 = vld [vmem:[#allocation7 + $0x138] sm:$0xff]
    %v299 = vld [vmem:[#allocation7 + $0x140] sm:$0xff]
    %v300 = vld [vmem:[#allocation7 + $0x148] sm:$0xff]
    %v301 = vld [vmem:[#allocation7 + $0x150] sm:$0xff]
    %v302 = vld [vmem:[#allocation7 + $0x158] sm:$0xff]
    %v303 = vld [vmem:[#allocation7 + $0x160] sm:$0xff]
    %v304 = vld [vmem:[#allocation7 + $0x168] sm:$0xff]
    %v305 = vld [vmem:[#allocation7 + $0x170] sm:$0xff]
    %v306 = vld [vmem:[#allocation7 + $0x178] sm:$0xff]
    %307 = vmatpush.msra.mxu0 %v304
    %308 = vmatpush.msra.mxu0 %v301
    %309 = vmatpush.msra.mxu0 %v298
    %310 = vmatpush.msra.mxu0 %v295
    %311 = vmatpush.msra.mxu0 %v292
    %312 = vmatpush.msra.mxu0 %v289
    %313 = vmatpush.msra.mxu0 %v286
    %314 = vmatpush.msra.mxu0 %v283
    %315 = vmatpush.msra.mxu0 %v280
    %316 = vmatpush.msra.mxu0 %v277
    %317 = vmatpush.msra.mxu0 %v274
    %318 = vmatpush.msra.mxu0 %v271
    %319 = vmatpush.msra.mxu0 %v268
    %320 = vmatpush.msra.mxu0 %v265
    %321 = vmatpush.msra.mxu0 %v262
    %322 = vmatpush.msra.mxu0 %v259
    %323 = vmatmul.f32.gmra.mxu0 %v257
    %v324 = vpop.f32.mrf.mxu0
    %v325 = vadd.f32 0.0, %v324
    %326 = vmatmul.f32.gmra.mxu0 %v258
    %v327 = vpop.f32.mrf.mxu0
    %v328 = vadd.f32 0.0, %v327
    %329 = vdwg.mxu0
    %330 = vmatpush.msra.mxu0 %v305
    %331 = vmatpush.msra.mxu0 %v302
    %332 = vmatpush.msra.mxu0 %v299
    %333 = vmatpush.msra.mxu0 %v296
    %334 = vmatpush.msra.mxu0 %v293
    %335 = vmatpush.msra.mxu0 %v290
    %336 = vmatpush.msra.mxu0 %v287
    %337 = vmatpush.msra.mxu0 %v284
    %338 = vmatpush.msra.mxu0 %v281
    %339 = vmatpush.msra.mxu0 %v278
    %340 = vmatpush.msra.mxu0 %v275
    %341 = vmatpush.msra.mxu0 %v272
    %342 = vmatpush.msra.mxu0 %v269
    %343 = vmatpush.msra.mxu0 %v266
    %344 = vmatpush.msra.mxu0 %v263
    %345 = vmatpush.msra.mxu0 %v260
    %346 = vmatmul.f32.gmra.mxu0 %v257
    %v347 = vpop.f32.mrf.mxu0
    %v348 = vadd.f32 0.0, %v347
    %349 = vmatmul.f32.gmra.mxu0 %v258
    %v350 = vpop.f32.mrf.mxu0
    %v351 = vadd.f32 0.0, %v350
    %352 = vdwg.mxu0
    %353 = vmatpush.msra.mxu0 %v306
    %354 = vmatpush.msra.mxu0 %v303
    %355 = vmatpush.msra.mxu0 %v300
    %356 = vmatpush.msra.mxu0 %v297
    %357 = vmatpush.msra.mxu0 %v294
    %358 = vmatpush.msra.mxu0 %v291
    %359 = vmatpush.msra.mxu0 %v288
    %360 = vmatpush.msra.mxu0 %v285
    %361 = vmatpush.msra.mxu0 %v282
    %362 = vmatpush.msra.mxu0 %v279
    %363 = vmatpush.msra.mxu0 %v276
    %364 = vmatpush.msra.mxu0 %v273
    %365 = vmatpush.msra.mxu0 %v270
    %366 = vmatpush.msra.mxu0 %v267
    %367 = vmatpush.msra.mxu0 %v264
    %368 = vmatpush.msra.mxu0 %v261
    %369 = vmatmul.f32.gmra.mxu0 %v257
    %v370 = vpop.f32.mrf.mxu0
    %v371 = vadd.f32 0.0, %v370
    %372 = vmatmul.f32.gmra.mxu0 %v258
    %v373 = vpop.f32.mrf.mxu0
    %v374 = vadd.f32 0.0, %v373
    %375 = vdwg.mxu0
    %v376 = vld [vmem:[#allocation8] sm:$0xff]
    %v377 = vld [vmem:[#allocation8 + $0x8] sm:$0xff]
    %v378 = vmul.f32 %v325, %v376
    %v379 = vmul.f32 %v328, %v377
    %380 = vrot.lane.b32.xlu0 %v325, 64
    %v381 = vpop.permute.xlu0 %380
    %382 = vrot.lane.b32.xlu0 %v328, 64
    %v383 = vpop.permute.xlu0 %382
    %v384 = vld [vmem:[#allocation10] sm:$0xff]
    %v385 = vld [vmem:[#allocation10 + $0x8] sm:$0xff]
    %v386 = vmul.f32 %v381, %v384
    %v387 = vmul.f32 %v383, %v385
    %v388 = vadd.f32 %v378, %v386
    %v389 = vadd.f32 %v379, %v387
    %v390 = vld [vmem:[#allocation11] sm:$0xff]
    %v391 = vld [vmem:[#allocation11 + $0x8] sm:$0xff]
    %v392 = vmul.f32 %v348, %v390
    %v393 = vmul.f32 %v351, %v391
    %394 = vrot.lane.b32.xlu0 %v348, 64
    %v395 = vpop.permute.xlu0 %394
    %396 = vrot.lane.b32.xlu0 %v351, 64
    %v397 = vpop.permute.xlu0 %396
    %v398 = vld [vmem:[#allocation13] sm:$0xff]
    %v399 = vld [vmem:[#allocation13 + $0x8] sm:$0xff]
    %v400 = vmul.f32 %v395, %v398
    %v401 = vmul.f32 %v397, %v399
    %v402 = vadd.f32 %v392, %v400
    %v403 = vadd.f32 %v393, %v401
    %v404 = vld [vmem:[%s8] sm:$0xff]
    %v405 = vld [vmem:[%s8 + $0x8] sm:$0xff]
    %v406 = vld [vmem:[%s8 + $0x10] sm:$0xff]
    %v407 = vld [vmem:[%s8 + $0x18] sm:$0xff]
    %v408 = vld [vmem:[%s8 + $0x20] sm:$0xff]
    %v409 = vld [vmem:[%s8 + $0x28] sm:$0xff]
    %v410 = vld [vmem:[%s8 + $0x30] sm:$0xff]
    %v411 = vld [vmem:[%s8 + $0x38] sm:$0xff]
    %v412 = vld [vmem:[%s8 + $0x40] sm:$0xff]
    %v413 = vld [vmem:[%s8 + $0x48] sm:$0xff]
    %v414 = vld [vmem:[%s8 + $0x50] sm:$0xff]
    %v415 = vld [vmem:[%s8 + $0x58] sm:$0xff]
    %v416 = vld [vmem:[%s8 + $0x60] sm:$0xff]
    %v417 = vld [vmem:[%s8 + $0x68] sm:$0xff]
    %v418 = vld [vmem:[%s8 + $0x70] sm:$0xff]
    %v419 = vld [vmem:[%s8 + $0x78] sm:$0xff]
    %vm420 = vcmask 130048
    %v422 = vsel %vm420, %v404, 0
    %v425 = vsel %vm420, %v405, 0
    %v428 = vsel %vm420, %v406, 0
    %v431 = vsel %vm420, %v407, 0
    %v434 = vsel %vm420, %v408, 0
    %v437 = vsel %vm420, %v409, 0
    %v440 = vsel %vm420, %v410, 0
    %v443 = vsel %vm420, %v411, 0
    %v446 = vsel %vm420, %v412, 0
    %v449 = vsel %vm420, %v413, 0
    %v452 = vsel %vm420, %v414, 0
    %v455 = vsel %vm420, %v415, 0
    %v458 = vsel %vm420, %v416, 0
    %v461 = vsel %vm420, %v417, 0
    %v464 = vsel %vm420, %v418, 0
    %v467 = vsel %vm420, %v419, 0
    %469 = vmatpush.msra.mxu0 0.0
    %470 = vmatpush.msra.mxu0 0.0
    %471 = vmatpush.msra.mxu0 0.0
    %472 = vmatpush.msra.mxu0 0.0
    %473 = vmatpush.msra.mxu0 0.0
    %474 = vmatpush.msra.mxu0 0.0
    %475 = vmatpush.msra.mxu0 0.0
    %476 = vmatpush.msra.mxu0 0.0
    %477 = vmatpush.msra.mxu0 0.0
    %478 = vmatpush.msra.mxu0 0.0
    %479 = vmatpush.msra.mxu0 0.0
    %480 = vmatpush.msra.mxu0 0.0
    %481 = vmatpush.msra.mxu0 0.0
    %482 = vmatpush.msra.mxu0 0.0
    %483 = vmatpush.msra.mxu0 %v389
    %484 = vmatpush.msra.mxu0 %v388
    %485 = vmatmul.f32.gmra.mxu0 %v422
    %v486 = vpop.f32.mrf.mxu0
    %v487 = vadd.f32 0.0, %v486
    %488 = vmatmul.f32.gmra.mxu0 %v425
    %v489 = vpop.f32.mrf.mxu0
    %v490 = vadd.f32 0.0, %v489
    %491 = vmatmul.f32.gmra.mxu0 %v428
    %v492 = vpop.f32.mrf.mxu0
    %v493 = vadd.f32 0.0, %v492
    %494 = vmatmul.f32.gmra.mxu0 %v431
    %v495 = vpop.f32.mrf.mxu0
    %v496 = vadd.f32 0.0, %v495
    %497 = vmatmul.f32.gmra.mxu0 %v434
    %v498 = vpop.f32.mrf.mxu0
    %v499 = vadd.f32 0.0, %v498
    %500 = vmatmul.f32.gmra.mxu0 %v437
    %v501 = vpop.f32.mrf.mxu0
    %v502 = vadd.f32 0.0, %v501
    %503 = vmatmul.f32.gmra.mxu0 %v440
    %v504 = vpop.f32.mrf.mxu0
    %v505 = vadd.f32 0.0, %v504
    %506 = vmatmul.f32.gmra.mxu0 %v443
    %v507 = vpop.f32.mrf.mxu0
    %v508 = vadd.f32 0.0, %v507
    %509 = vmatmul.f32.gmra.mxu0 %v446
    %v510 = vpop.f32.mrf.mxu0
    %v511 = vadd.f32 0.0, %v510
    %512 = vmatmul.f32.gmra.mxu0 %v449
    %v513 = vpop.f32.mrf.mxu0
    %v514 = vadd.f32 0.0, %v513
    %515 = vmatmul.f32.gmra.mxu0 %v452
    %v516 = vpop.f32.mrf.mxu0
    %v517 = vadd.f32 0.0, %v516
    %518 = vmatmul.f32.gmra.mxu0 %v455
    %v519 = vpop.f32.mrf.mxu0
    %v520 = vadd.f32 0.0, %v519
    %521 = vmatmul.f32.gmra.mxu0 %v458
    %v522 = vpop.f32.mrf.mxu0
    %v523 = vadd.f32 0.0, %v522
    %524 = vmatmul.f32.gmra.mxu0 %v461
    %v525 = vpop.f32.mrf.mxu0
    %v526 = vadd.f32 0.0, %v525
    %527 = vmatmul.f32.gmra.mxu0 %v464
    %v528 = vpop.f32.mrf.mxu0
    %v529 = vadd.f32 0.0, %v528
    %530 = vmatmul.f32.gmra.mxu0 %v467
    %v531 = vpop.f32.mrf.mxu0
    %v532 = vadd.f32 0.0, %v531
    %533 = vdwg.mxu0
    %v534 = vld [vmem:[%s10] sm:$0xff]
    %v535 = vld [vmem:[%s10 + $0x8] sm:$0xff]
    %v536 = vld [vmem:[%s10 + $0x10] sm:$0xff]
    %v537 = vld [vmem:[%s10 + $0x18] sm:$0xff]
    %v538 = vld [vmem:[%s10 + $0x20] sm:$0xff]
    %v539 = vld [vmem:[%s10 + $0x28] sm:$0xff]
    %v540 = vld [vmem:[%s10 + $0x30] sm:$0xff]
    %v541 = vld [vmem:[%s10 + $0x38] sm:$0xff]
    %v542 = vld [vmem:[%s10 + $0x40] sm:$0xff]
    %v543 = vld [vmem:[%s10 + $0x48] sm:$0xff]
    %v544 = vld [vmem:[%s10 + $0x50] sm:$0xff]
    %v545 = vld [vmem:[%s10 + $0x58] sm:$0xff]
    %v546 = vld [vmem:[%s10 + $0x60] sm:$0xff]
    %v547 = vld [vmem:[%s10 + $0x68] sm:$0xff]
    %v548 = vld [vmem:[%s10 + $0x70] sm:$0xff]
    %v549 = vld [vmem:[%s10 + $0x78] sm:$0xff]
    %v550 = vmul.f32 %v487, %v534
    %v551 = vmul.f32 %v490, %v535
    %v552 = vmul.f32 %v493, %v536
    %v553 = vmul.f32 %v496, %v537
    %v554 = vmul.f32 %v499, %v538
    %v555 = vmul.f32 %v502, %v539
    %v556 = vmul.f32 %v505, %v540
    %v557 = vmul.f32 %v508, %v541
    %v558 = vmul.f32 %v511, %v542
    %v559 = vmul.f32 %v514, %v543
    %v560 = vmul.f32 %v517, %v544
    %v561 = vmul.f32 %v520, %v545
    %v562 = vmul.f32 %v523, %v546
    %v563 = vmul.f32 %v526, %v547
    %v564 = vmul.f32 %v529, %v548
    %v565 = vmul.f32 %v532, %v549
    %v566 = vld [vmem:[%s11] sm:$0xff]
    %v567 = vld [vmem:[%s11 + $0x8] sm:$0xff]
    %v568 = vld [vmem:[%s11 + $0x10] sm:$0xff]
    %v569 = vld [vmem:[%s11 + $0x18] sm:$0xff]
    %v570 = vld [vmem:[%s11 + $0x20] sm:$0xff]
    %v571 = vld [vmem:[%s11 + $0x28] sm:$0xff]
    %v572 = vld [vmem:[%s11 + $0x30] sm:$0xff]
    %v573 = vld [vmem:[%s11 + $0x38] sm:$0xff]
    %v574 = vld [vmem:[%s11 + $0x40] sm:$0xff]
    %v575 = vld [vmem:[%s11 + $0x48] sm:$0xff]
    %v576 = vld [vmem:[%s11 + $0x50] sm:$0xff]
    %v577 = vld [vmem:[%s11 + $0x58] sm:$0xff]
    %v578 = vld [vmem:[%s11 + $0x60] sm:$0xff]
    %v579 = vld [vmem:[%s11 + $0x68] sm:$0xff]
    %v580 = vld [vmem:[%s11 + $0x70] sm:$0xff]
    %v581 = vld [vmem:[%s11 + $0x78] sm:$0xff]
    %582 = vmatpush.msra.mxu0 %v581
    %583 = vmatpush.msra.mxu0 %v580
    %584 = vmatpush.msra.mxu0 %v579
    %585 = vmatpush.msra.mxu0 %v578
    %586 = vmatpush.msra.mxu0 %v577
    %587 = vmatpush.msra.mxu0 %v576
    %588 = vmatpush.msra.mxu0 %v575
    %589 = vmatpush.msra.mxu0 %v574
    %590 = vmatpush.msra.mxu0 %v573
    %591 = vmatpush.msra.mxu0 %v572
    %592 = vmatpush.msra.mxu0 %v571
    %593 = vmatpush.msra.mxu0 %v570
    %594 = vmatpush.msra.mxu0 %v569
    %595 = vmatpush.msra.mxu0 %v568
    %596 = vmatpush.msra.mxu0 %v567
    %597 = vmatpush.msra.mxu0 %v566
    %598 = vmatmul.f32.gmra.mxu0 %v550
    %v599 = vpop.f32.mrf.mxu0
    %v600 = vadd.f32 0.0, %v599
    %601 = vmatmul.f32.gmra.mxu0 %v551
    %v602 = vpop.f32.mrf.mxu0
    %v603 = vadd.f32 0.0, %v602
    %604 = vmatmul.f32.gmra.mxu0 %v552
    %v605 = vpop.f32.mrf.mxu0
    %v606 = vadd.f32 0.0, %v605
    %607 = vmatmul.f32.gmra.mxu0 %v553
    %v608 = vpop.f32.mrf.mxu0
    %v609 = vadd.f32 0.0, %v608
    %610 = vmatmul.f32.gmra.mxu0 %v554
    %v611 = vpop.f32.mrf.mxu0
    %v612 = vadd.f32 0.0, %v611
    %613 = vmatmul.f32.gmra.mxu0 %v555
    %v614 = vpop.f32.mrf.mxu0
    %v615 = vadd.f32 0.0, %v614
    %616 = vmatmul.f32.gmra.mxu0 %v556
    %v617 = vpop.f32.mrf.mxu0
    %v618 = vadd.f32 0.0, %v617
    %619 = vmatmul.f32.gmra.mxu0 %v557
    %v620 = vpop.f32.mrf.mxu0
    %v621 = vadd.f32 0.0, %v620
    %622 = vmatmul.f32.gmra.mxu0 %v558
    %v623 = vpop.f32.mrf.mxu0
    %v624 = vadd.f32 0.0, %v623
    %625 = vmatmul.f32.gmra.mxu0 %v559
    %v626 = vpop.f32.mrf.mxu0
    %v627 = vadd.f32 0.0, %v626
    %628 = vmatmul.f32.gmra.mxu0 %v560
    %v629 = vpop.f32.mrf.mxu0
    %v630 = vadd.f32 0.0, %v629
    %631 = vmatmul.f32.gmra.mxu0 %v561
    %v632 = vpop.f32.mrf.mxu0
    %v633 = vadd.f32 0.0, %v632
    %634 = vmatmul.f32.gmra.mxu0 %v562
    %v635 = vpop.f32.mrf.mxu0
    %v636 = vadd.f32 0.0, %v635
    %637 = vmatmul.f32.gmra.mxu0 %v563
    %v638 = vpop.f32.mrf.mxu0
    %v639 = vadd.f32 0.0, %v638
    %640 = vmatmul.f32.gmra.mxu0 %v564
    %v641 = vpop.f32.mrf.mxu0
    %v642 = vadd.f32 0.0, %v641
    %643 = vmatmul.f32.gmra.mxu0 %v565
    %v644 = vpop.f32.mrf.mxu0
    %v645 = vadd.f32 0.0, %v644
    %646 = vdwg.mxu0
    %v647 = vld [vmem:[%s12] sm:$0xff]
    %v648 = vld [vmem:[%s12 + $0x8] sm:$0xff]
    %v649 = vld [vmem:[%s12 + $0x10] sm:$0xff]
    %v650 = vld [vmem:[%s12 + $0x18] sm:$0xff]
    %v651 = vld [vmem:[%s12 + $0x20] sm:$0xff]
    %v652 = vld [vmem:[%s12 + $0x28] sm:$0xff]
    %v653 = vld [vmem:[%s12 + $0x30] sm:$0xff]
    %v654 = vld [vmem:[%s12 + $0x38] sm:$0xff]
    %v655 = vld [vmem:[%s12 + $0x40] sm:$0xff]
    %v656 = vld [vmem:[%s12 + $0x48] sm:$0xff]
    %v657 = vld [vmem:[%s12 + $0x50] sm:$0xff]
    %v658 = vld [vmem:[%s12 + $0x58] sm:$0xff]
    %v659 = vld [vmem:[%s12 + $0x60] sm:$0xff]
    %v660 = vld [vmem:[%s12 + $0x68] sm:$0xff]
    %v661 = vld [vmem:[%s12 + $0x70] sm:$0xff]
    %v662 = vld [vmem:[%s12 + $0x78] sm:$0xff]
    %v664 = vsel %vm420, %v647, 0
    %v667 = vsel %vm420, %v648, 0
    %v670 = vsel %vm420, %v649, 0
    %v673 = vsel %vm420, %v650, 0
    %v676 = vsel %vm420, %v651, 0
    %v679 = vsel %vm420, %v652, 0
    %v682 = vsel %vm420, %v653, 0
    %v685 = vsel %vm420, %v654, 0
    %v688 = vsel %vm420, %v655, 0
    %v691 = vsel %vm420, %v656, 0
    %v694 = vsel %vm420, %v657, 0
    %v697 = vsel %vm420, %v658, 0
    %v700 = vsel %vm420, %v659, 0
    %v703 = vsel %vm420, %v660, 0
    %v706 = vsel %vm420, %v661, 0
    %v709 = vsel %vm420, %v662, 0
    %711 = vmatpush.msra.mxu0 0.0
    %712 = vmatpush.msra.mxu0 0.0
    %713 = vmatpush.msra.mxu0 0.0
    %714 = vmatpush.msra.mxu0 0.0
    %715 = vmatpush.msra.mxu0 0.0
    %716 = vmatpush.msra.mxu0 0.0
    %717 = vmatpush.msra.mxu0 0.0
    %718 = vmatpush.msra.mxu0 0.0
    %719 = vmatpush.msra.mxu0 0.0
    %720 = vmatpush.msra.mxu0 0.0
    %721 = vmatpush.msra.mxu0 0.0
    %722 = vmatpush.msra.mxu0 0.0
    %723 = vmatpush.msra.mxu0 0.0
    %724 = vmatpush.msra.mxu0 0.0
    %725 = vmatpush.msra.mxu0 %v403
    %726 = vmatpush.msra.mxu0 %v402
    %727 = vmatmul.f32.gmra.mxu0 %v664
    %v728 = vpop.f32.mrf.mxu0
    %v729 = vadd.f32 0.0, %v728
    %730 = vmatmul.f32.gmra.mxu0 %v667
    %v731 = vpop.f32.mrf.mxu0
    %v732 = vadd.f32 0.0, %v731
    %733 = vmatmul.f32.gmra.mxu0 %v670
    %v734 = vpop.f32.mrf.mxu0
    %v735 = vadd.f32 0.0, %v734
    %736 = vmatmul.f32.gmra.mxu0 %v673
    %v737 = vpop.f32.mrf.mxu0
    %v738 = vadd.f32 0.0, %v737
    %739 = vmatmul.f32.gmra.mxu0 %v676
    %v740 = vpop.f32.mrf.mxu0
    %v741 = vadd.f32 0.0, %v740
    %742 = vmatmul.f32.gmra.mxu0 %v679
    %v743 = vpop.f32.mrf.mxu0
    %v744 = vadd.f32 0.0, %v743
    %745 = vmatmul.f32.gmra.mxu0 %v682
    %v746 = vpop.f32.mrf.mxu0
    %v747 = vadd.f32 0.0, %v746
    %748 = vmatmul.f32.gmra.mxu0 %v685
    %v749 = vpop.f32.mrf.mxu0
    %v750 = vadd.f32 0.0, %v749
    %751 = vmatmul.f32.gmra.mxu0 %v688
    %v752 = vpop.f32.mrf.mxu0
    %v753 = vadd.f32 0.0, %v752
    %754 = vmatmul.f32.gmra.mxu0 %v691
    %v755 = vpop.f32.mrf.mxu0
    %v756 = vadd.f32 0.0, %v755
    %757 = vmatmul.f32.gmra.mxu0 %v694
    %v758 = vpop.f32.mrf.mxu0
    %v759 = vadd.f32 0.0, %v758
    %760 = vmatmul.f32.gmra.mxu0 %v697
    %v761 = vpop.f32.mrf.mxu0
    %v762 = vadd.f32 0.0, %v761
    %763 = vmatmul.f32.gmra.mxu0 %v700
    %v764 = vpop.f32.mrf.mxu0
    %v765 = vadd.f32 0.0, %v764
    %766 = vmatmul.f32.gmra.mxu0 %v703
    %v767 = vpop.f32.mrf.mxu0
    %v768 = vadd.f32 0.0, %v767
    %769 = vmatmul.f32.gmra.mxu0 %v706
    %v770 = vpop.f32.mrf.mxu0
    %v771 = vadd.f32 0.0, %v770
    %772 = vmatmul.f32.gmra.mxu0 %v709
    %v773 = vpop.f32.mrf.mxu0
    %v774 = vadd.f32 0.0, %v773
    %775 = vdwg.mxu0
    %776 = vmatpush.msra.mxu0 0.0
    %777 = vmatpush.msra.mxu0 0.0
    %778 = vmatpush.msra.mxu0 0.0
    %779 = vmatpush.msra.mxu0 0.0
    %780 = vmatpush.msra.mxu0 0.0
    %781 = vmatpush.msra.mxu0 0.0
    %782 = vmatpush.msra.mxu0 0.0
    %783 = vmatpush.msra.mxu0 0.0
    %784 = vmatpush.msra.mxu0 0.0
    %785 = vmatpush.msra.mxu0 0.0
    %786 = vmatpush.msra.mxu0 0.0
    %787 = vmatpush.msra.mxu0 0.0
    %788 = vmatpush.msra.mxu0 0.0
    %789 = vmatpush.msra.mxu0 0.0
    %790 = vmatpush.msra.mxu0 %v374
    %791 = vmatpush.msra.mxu0 %v371
    %792 = vmatmul.f32.gmra.mxu0 %v664
    %v793 = vpop.f32.mrf.mxu0
    %v794 = vadd.f32 0.0, %v793
    %795 = vmatmul.f32.gmra.mxu0 %v667
    %v796 = vpop.f32.mrf.mxu0
    %v797 = vadd.f32 0.0, %v796
    %798 = vmatmul.f32.gmra.mxu0 %v670
    %v799 = vpop.f32.mrf.mxu0
    %v800 = vadd.f32 0.0, %v799
    %801 = vmatmul.f32.gmra.mxu0 %v673
    %v802 = vpop.f32.mrf.mxu0
    %v803 = vadd.f32 0.0, %v802
    %804 = vmatmul.f32.gmra.mxu0 %v676
    %v805 = vpop.f32.mrf.mxu0
    %v806 = vadd.f32 0.0, %v805
    %807 = vmatmul.f32.gmra.mxu0 %v679
    %v808 = vpop.f32.mrf.mxu0
    %v809 = vadd.f32 0.0, %v808
    %810 = vmatmul.f32.gmra.mxu0 %v682
    %v811 = vpop.f32.mrf.mxu0
    %v812 = vadd.f32 0.0, %v811
    %813 = vmatmul.f32.gmra.mxu0 %v685
    %v814 = vpop.f32.mrf.mxu0
    %v815 = vadd.f32 0.0, %v814
    %816 = vmatmul.f32.gmra.mxu0 %v688
    %v817 = vpop.f32.mrf.mxu0
    %v818 = vadd.f32 0.0, %v817
    %819 = vmatmul.f32.gmra.mxu0 %v691
    %v820 = vpop.f32.mrf.mxu0
    %v821 = vadd.f32 0.0, %v820
    %822 = vmatmul.f32.gmra.mxu0 %v694
    %v823 = vpop.f32.mrf.mxu0
    %v824 = vadd.f32 0.0, %v823
    %825 = vmatmul.f32.gmra.mxu0 %v697
    %v826 = vpop.f32.mrf.mxu0
    %v827 = vadd.f32 0.0, %v826
    %828 = vmatmul.f32.gmra.mxu0 %v700
    %v829 = vpop.f32.mrf.mxu0
    %v830 = vadd.f32 0.0, %v829
    %831 = vmatmul.f32.gmra.mxu0 %v703
    %v832 = vpop.f32.mrf.mxu0
    %v833 = vadd.f32 0.0, %v832
    %834 = vmatmul.f32.gmra.mxu0 %v706
    %v835 = vpop.f32.mrf.mxu0
    %v836 = vadd.f32 0.0, %v835
    %837 = vmatmul.f32.gmra.mxu0 %v709
    %v838 = vpop.f32.mrf.mxu0
    %v839 = vadd.f32 0.0, %v838
    %840 = vdwg.mxu0
    %v841 = vmul.f32 %v600, %v729
    %v842 = vmul.f32 %v603, %v732
    %v843 = vmul.f32 %v606, %v735
    %v844 = vmul.f32 %v609, %v738
    %v845 = vmul.f32 %v612, %v741
    %v846 = vmul.f32 %v615, %v744
    %v847 = vmul.f32 %v618, %v747
    %v848 = vmul.f32 %v621, %v750
    %v849 = vmul.f32 %v624, %v753
    %v850 = vmul.f32 %v627, %v756
    %v851 = vmul.f32 %v630, %v759
    %v852 = vmul.f32 %v633, %v762
    %v853 = vmul.f32 %v636, %v765
    %v854 = vmul.f32 %v639, %v768
    %v855 = vmul.f32 %v642, %v771
    %v856 = vmul.f32 %v645, %v774
    %v857 = vld [vmem:[%s13] sm:$0xff]
    %v858 = vld [vmem:[%s13 + $0x8] sm:$0xff]
    %v859 = vld [vmem:[%s13 + $0x10] sm:$0xff]
    %v860 = vld [vmem:[%s13 + $0x18] sm:$0xff]
    %v861 = vld [vmem:[%s13 + $0x20] sm:$0xff]
    %v862 = vld [vmem:[%s13 + $0x28] sm:$0xff]
    %v863 = vld [vmem:[%s13 + $0x30] sm:$0xff]
    %v864 = vld [vmem:[%s13 + $0x38] sm:$0xff]
    %v865 = vld [vmem:[%s13 + $0x40] sm:$0xff]
    %v866 = vld [vmem:[%s13 + $0x48] sm:$0xff]
    %v867 = vld [vmem:[%s13 + $0x50] sm:$0xff]
    %v868 = vld [vmem:[%s13 + $0x58] sm:$0xff]
    %v869 = vld [vmem:[%s13 + $0x60] sm:$0xff]
    %v870 = vld [vmem:[%s13 + $0x68] sm:$0xff]
    %v871 = vld [vmem:[%s13 + $0x70] sm:$0xff]
    %v872 = vld [vmem:[%s13 + $0x78] sm:$0xff]
    %873 = vmatpush.msra.mxu0 %v872
    %874 = vmatpush.msra.mxu0 %v871
    %875 = vmatpush.msra.mxu0 %v870
    %876 = vmatpush.msra.mxu0 %v869
    %877 = vmatpush.msra.mxu0 %v868
    %878 = vmatpush.msra.mxu0 %v867
    %879 = vmatpush.msra.mxu0 %v866
    %880 = vmatpush.msra.mxu0 %v865
    %881 = vmatpush.msra.mxu0 %v864
    %882 = vmatpush.msra.mxu0 %v863
    %883 = vmatpush.msra.mxu0 %v862
    %884 = vmatpush.msra.mxu0 %v861
    %885 = vmatpush.msra.mxu0 %v860
    %886 = vmatpush.msra.mxu0 %v859
    %887 = vmatpush.msra.mxu0 %v858
    %888 = vmatpush.msra.mxu0 %v857
    %889 = vmatmul.f32.gmra.mxu0 %v841
    %v890 = vpop.f32.mrf.mxu0
    %v891 = vadd.f32 0.0, %v890
    %892 = vmatmul.f32.gmra.mxu0 %v842
    %v893 = vpop.f32.mrf.mxu0
    %v894 = vadd.f32 0.0, %v893
    %895 = vmatmul.f32.gmra.mxu0 %v843
    %v896 = vpop.f32.mrf.mxu0
    %v897 = vadd.f32 0.0, %v896
    %898 = vmatmul.f32.gmra.mxu0 %v844
    %v899 = vpop.f32.mrf.mxu0
    %v900 = vadd.f32 0.0, %v899
    %901 = vmatmul.f32.gmra.mxu0 %v845
    %v902 = vpop.f32.mrf.mxu0
    %v903 = vadd.f32 0.0, %v902
    %904 = vmatmul.f32.gmra.mxu0 %v846
    %v905 = vpop.f32.mrf.mxu0
    %v906 = vadd.f32 0.0, %v905
    %907 = vmatmul.f32.gmra.mxu0 %v847
    %v908 = vpop.f32.mrf.mxu0
    %v909 = vadd.f32 0.0, %v908
    %910 = vmatmul.f32.gmra.mxu0 %v848
    %v911 = vpop.f32.mrf.mxu0
    %v912 = vadd.f32 0.0, %v911
    %913 = vmatmul.f32.gmra.mxu0 %v849
    %v914 = vpop.f32.mrf.mxu0
    %v915 = vadd.f32 0.0, %v914
    %916 = vmatmul.f32.gmra.mxu0 %v850
    %v917 = vpop.f32.mrf.mxu0
    %v918 = vadd.f32 0.0, %v917
    %919 = vmatmul.f32.gmra.mxu0 %v851
    %v920 = vpop.f32.mrf.mxu0
    %v921 = vadd.f32 0.0, %v920
    %922 = vmatmul.f32.gmra.mxu0 %v852
    %v923 = vpop.f32.mrf.mxu0
    %v924 = vadd.f32 0.0, %v923
    %925 = vmatmul.f32.gmra.mxu0 %v853
    %v926 = vpop.f32.mrf.mxu0
    %v927 = vadd.f32 0.0, %v926
    %928 = vmatmul.f32.gmra.mxu0 %v854
    %v929 = vpop.f32.mrf.mxu0
    %v930 = vadd.f32 0.0, %v929
    %931 = vmatmul.f32.gmra.mxu0 %v855
    %v932 = vpop.f32.mrf.mxu0
    %v933 = vadd.f32 0.0, %v932
    %934 = vmatmul.f32.gmra.mxu0 %v856
    %v935 = vpop.f32.mrf.mxu0
    %v936 = vadd.f32 0.0, %v935
    %937 = vdwg.mxu0
    %vm938 = vcmask 64512
    %v939 = vsel %vm938, %v891, -inf
    %940 = vmax.xlane.f32.xlu0 %v939
    %v941 = vpop.xlane.xlu0 %940
    %v942 = vsel %vm938, %v894, -inf
    %943 = vmax.xlane.f32.xlu0 %v942
    %v944 = vpop.xlane.xlu0 %943
    %v945 = vsel %vm938, %v897, -inf
    %946 = vmax.xlane.f32.xlu0 %v945
    %v947 = vpop.xlane.xlu0 %946
    %v948 = vsel %vm938, %v900, -inf
    %949 = vmax.xlane.f32.xlu0 %v948
    %v950 = vpop.xlane.xlu0 %949
    %v951 = vsel %vm938, %v903, -inf
    %952 = vmax.xlane.f32.xlu0 %v951
    %v953 = vpop.xlane.xlu0 %952
    %v954 = vsel %vm938, %v906, -inf
    %955 = vmax.xlane.f32.xlu0 %v954
    %v956 = vpop.xlane.xlu0 %955
    %v957 = vsel %vm938, %v909, -inf
    %958 = vmax.xlane.f32.xlu0 %v957
    %v959 = vpop.xlane.xlu0 %958
    %v960 = vsel %vm938, %v912, -inf
    %961 = vmax.xlane.f32.xlu0 %v960
    %v962 = vpop.xlane.xlu0 %961
    %v963 = vsel %vm938, %v915, -inf
    %964 = vmax.xlane.f32.xlu0 %v963
    %v965 = vpop.xlane.xlu0 %964
    %v966 = vsel %vm938, %v918, -inf
    %967 = vmax.xlane.f32.xlu0 %v966
    %v968 = vpop.xlane.xlu0 %967
    %v969 = vsel %vm938, %v921, -inf
    %970 = vmax.xlane.f32.xlu0 %v969
    %v971 = vpop.xlane.xlu0 %970
    %v972 = vsel %vm938, %v924, -inf
    %973 = vmax.xlane.f32.xlu0 %v972
    %v974 = vpop.xlane.xlu0 %973
    %v975 = vsel %vm938, %v927, -inf
    %976 = vmax.xlane.f32.xlu0 %v975
    %v977 = vpop.xlane.xlu0 %976
    %v978 = vsel %vm938, %v930, -inf
    %979 = vmax.xlane.f32.xlu0 %v978
    %v980 = vpop.xlane.xlu0 %979
    %v981 = vsel %vm938, %v933, -inf
    %982 = vmax.xlane.f32.xlu0 %v981
    %v983 = vpop.xlane.xlu0 %982
    %v984 = vsel %vm938, %v936, -inf
    %985 = vmax.xlane.f32.xlu0 %v984
    %v986 = vpop.xlane.xlu0 %985
    %v987 = vsub.f32 %v891, %v941
    %v988 = vsub.f32 %v894, %v944
    %v989 = vsub.f32 %v897, %v947
    %v990 = vsub.f32 %v900, %v950
    %v991 = vsub.f32 %v903, %v953
    %v992 = vsub.f32 %v906, %v956
    %v993 = vsub.f32 %v909, %v959
    %v994 = vsub.f32 %v912, %v962
    %v995 = vsub.f32 %v915, %v965
    %v996 = vsub.f32 %v918, %v968
    %v997 = vsub.f32 %v921, %v971
    %v998 = vsub.f32 %v924, %v974
    %v999 = vsub.f32 %v927, %v977
    %v1000 = vsub.f32 %v930, %v980
    %v1001 = vsub.f32 %v933, %v983
    %v1002 = vsub.f32 %v936, %v986
    %v1003 = vmul.f32 %v987, 1.442695
    %v1004 = vpow.pop %v1003
    %v1005 = vmul.f32 %v988, 1.442695
    %v1006 = vpow.pop %v1005
    %v1007 = vmul.f32 %v989, 1.442695
    %v1008 = vpow.pop %v1007
    %v1009 = vmul.f32 %v990, 1.442695
    %v1010 = vpow.pop %v1009
    %v1011 = vmul.f32 %v991, 1.442695
    %v1012 = vpow.pop %v1011
    %v1013 = vmul.f32 %v992, 1.442695
    %v1014 = vpow.pop %v1013
    %v1015 = vmul.f32 %v993, 1.442695
    %v1016 = vpow.pop %v1015
    %v1017 = vmul.f32 %v994, 1.442695
    %v1018 = vpow.pop %v1017
    %v1019 = vmul.f32 %v995, 1.442695
    %v1020 = vpow.pop %v1019
    %v1021 = vmul.f32 %v996, 1.442695
    %v1022 = vpow.pop %v1021
    %v1023 = vmul.f32 %v997, 1.442695
    %v1024 = vpow.pop %v1023
    %v1025 = vmul.f32 %v998, 1.442695
    %v1026 = vpow.pop %v1025
    %v1027 = vmul.f32 %v999, 1.442695
    %v1028 = vpow.pop %v1027
    %v1029 = vmul.f32 %v1000, 1.442695
    %v1030 = vpow.pop %v1029
    %v1031 = vmul.f32 %v1001, 1.442695
    %v1032 = vpow.pop %v1031
    %v1033 = vmul.f32 %v1002, 1.442695
    %v1034 = vpow.pop %v1033
    %v1035 = vsel %vm938, %v1004, 0.0
    %1036 = vadd.xlane.f32.xlu0 %v1035
    %v1037 = vpop.xlane.xlu0 %1036
    %v1038 = vsel %vm938, %v1006, 0.0
    %1039 = vadd.xlane.f32.xlu0 %v1038
    %v1040 = vpop.xlane.xlu0 %1039
    %v1041 = vsel %vm938, %v1008, 0.0
    %1042 = vadd.xlane.f32.xlu0 %v1041
    %v1043 = vpop.xlane.xlu0 %1042
    %v1044 = vsel %vm938, %v1010, 0.0
    %1045 = vadd.xlane.f32.xlu0 %v1044
    %v1046 = vpop.xlane.xlu0 %1045
    %v1047 = vsel %vm938, %v1012, 0.0
    %1048 = vadd.xlane.f32.xlu0 %v1047
    %v1049 = vpop.xlane.xlu0 %1048
    %v1050 = vsel %vm938, %v1014, 0.0
    %1051 = vadd.xlane.f32.xlu0 %v1050
    %v1052 = vpop.xlane.xlu0 %1051
    %v1053 = vsel %vm938, %v1016, 0.0
    %1054 = vadd.xlane.f32.xlu0 %v1053
    %v1055 = vpop.xlane.xlu0 %1054
    %v1056 = vsel %vm938, %v1018, 0.0
    %1057 = vadd.xlane.f32.xlu0 %v1056
    %v1058 = vpop.xlane.xlu0 %1057
    %v1059 = vsel %vm938, %v1020, 0.0
    %1060 = vadd.xlane.f32.xlu0 %v1059
    %v1061 = vpop.xlane.xlu0 %1060
    %v1062 = vsel %vm938, %v1022, 0.0
    %1063 = vadd.xlane.f32.xlu0 %v1062
    %v1064 = vpop.xlane.xlu0 %1063
    %v1065 = vsel %vm938, %v1024, 0.0
    %1066 = vadd.xlane.f32.xlu0 %v1065
    %v1067 = vpop.xlane.xlu0 %1066
    %v1068 = vsel %vm938, %v1026, 0.0
    %1069 = vadd.xlane.f32.xlu0 %v1068
    %v1070 = vpop.xlane.xlu0 %1069
    %v1071 = vsel %vm938, %v1028, 0.0
    %1072 = vadd.xlane.f32.xlu0 %v1071
    %v1073 = vpop.xlane.xlu0 %1072
    %v1074 = vsel %vm938, %v1030, 0.0
    %1075 = vadd.xlane.f32.xlu0 %v1074
    %v1076 = vpop.xlane.xlu0 %1075
    %v1077 = vsel %vm938, %v1032, 0.0
    %1078 = vadd.xlane.f32.xlu0 %v1077
    %v1079 = vpop.xlane.xlu0 %1078
    %v1080 = vsel %vm938, %v1034, 0.0
    %1081 = vadd.xlane.f32.xlu0 %v1080
    %v1082 = vpop.xlane.xlu0 %1081
    %v1083 = vrcp.pop %v1037
    %v1084 = vrcp.pop %v1040
    %v1085 = vrcp.pop %v1043
    %v1086 = vrcp.pop %v1046
    %v1087 = vrcp.pop %v1049
    %v1088 = vrcp.pop %v1052
    %v1089 = vrcp.pop %v1055
    %v1090 = vrcp.pop %v1058
    %v1091 = vrcp.pop %v1061
    %v1092 = vrcp.pop %v1064
    %v1093 = vrcp.pop %v1067
    %v1094 = vrcp.pop %v1070
    %v1095 = vrcp.pop %v1073
    %v1096 = vrcp.pop %v1076
    %v1097 = vrcp.pop %v1079
    %v1098 = vrcp.pop %v1082
    %v1099 = vmul.f32 %v1004, %v1083
    %v1100 = vmul.f32 %v1006, %v1084
    %v1101 = vmul.f32 %v1008, %v1085
    %v1102 = vmul.f32 %v1010, %v1086
    %v1103 = vmul.f32 %v1012, %v1087
    %v1104 = vmul.f32 %v1014, %v1088
    %v1105 = vmul.f32 %v1016, %v1089
    %v1106 = vmul.f32 %v1018, %v1090
    %v1107 = vmul.f32 %v1020, %v1091
    %v1108 = vmul.f32 %v1022, %v1092
    %v1109 = vmul.f32 %v1024, %v1093
    %v1110 = vmul.f32 %v1026, %v1094
    %v1111 = vmul.f32 %v1028, %v1095
    %v1112 = vmul.f32 %v1030, %v1096
    %v1113 = vmul.f32 %v1032, %v1097
    %v1114 = vmul.f32 %v1034, %v1098
    %v1115 = vld [vmem:[%s14] sm:$0xff]
    %v1117 = vsel %vm938, %v1099, 0
    %v1120 = vsel %vm938, %v1100, 0
    %v1123 = vsel %vm938, %v1101, 0
    %v1126 = vsel %vm938, %v1102, 0
    %v1129 = vsel %vm938, %v1103, 0
    %v1132 = vsel %vm938, %v1104, 0
    %v1135 = vsel %vm938, %v1105, 0
    %v1138 = vsel %vm938, %v1106, 0
    %v1141 = vsel %vm938, %v1107, 0
    %v1144 = vsel %vm938, %v1108, 0
    %v1147 = vsel %vm938, %v1109, 0
    %v1150 = vsel %vm938, %v1110, 0
    %v1153 = vsel %vm938, %v1111, 0
    %v1156 = vsel %vm938, %v1112, 0
    %v1159 = vsel %vm938, %v1113, 0
    %v1162 = vsel %vm938, %v1114, 0
    %1164 = vmatpush.msra.mxu0 0.0
    %1165 = vmatpush.msra.mxu0 0.0
    %1166 = vmatpush.msra.mxu0 0.0
    %1167 = vmatpush.msra.mxu0 0.0
    %1168 = vmatpush.msra.mxu0 0.0
    %1169 = vmatpush.msra.mxu0 0.0
    %1170 = vmatpush.msra.mxu0 0.0
    %1171 = vmatpush.msra.mxu0 0.0
    %1172 = vmatpush.msra.mxu0 0.0
    %1173 = vmatpush.msra.mxu0 0.0
    %1174 = vmatpush.msra.mxu0 0.0
    %1175 = vmatpush.msra.mxu0 0.0
    %1176 = vmatpush.msra.mxu0 0.0
    %1177 = vmatpush.msra.mxu0 0.0
    %1178 = vmatpush.msra.mxu0 0.0
    %1179 = vmatpush.msra.mxu0 %v1115
    %1180 = vmatmul.f32.gmra.mxu0 %v1117
    %v1181 = vpop.f32.mrf.mxu0
    %v1182 = vadd.f32 0.0, %v1181
    %1183 = vmatmul.f32.gmra.mxu0 %v1120
    %v1184 = vpop.f32.mrf.mxu0
    %v1185 = vadd.f32 0.0, %v1184
    %1186 = vmatmul.f32.gmra.mxu0 %v1123
    %v1187 = vpop.f32.mrf.mxu0
    %v1188 = vadd.f32 0.0, %v1187
    %1189 = vmatmul.f32.gmra.mxu0 %v1126
    %v1190 = vpop.f32.mrf.mxu0
    %v1191 = vadd.f32 0.0, %v1190
    %1192 = vmatmul.f32.gmra.mxu0 %v1129
    %v1193 = vpop.f32.mrf.mxu0
    %v1194 = vadd.f32 0.0, %v1193
    %1195 = vmatmul.f32.gmra.mxu0 %v1132
    %v1196 = vpop.f32.mrf.mxu0
    %v1197 = vadd.f32 0.0, %v1196
    %1198 = vmatmul.f32.gmra.mxu0 %v1135
    %v1199 = vpop.f32.mrf.mxu0
    %v1200 = vadd.f32 0.0, %v1199
    %1201 = vmatmul.f32.gmra.mxu0 %v1138
    %v1202 = vpop.f32.mrf.mxu0
    %v1203 = vadd.f32 0.0, %v1202
    %1204 = vmatmul.f32.gmra.mxu0 %v1141
    %v1205 = vpop.f32.mrf.mxu0
    %v1206 = vadd.f32 0.0, %v1205
    %1207 = vmatmul.f32.gmra.mxu0 %v1144
    %v1208 = vpop.f32.mrf.mxu0
    %v1209 = vadd.f32 0.0, %v1208
    %1210 = vmatmul.f32.gmra.mxu0 %v1147
    %v1211 = vpop.f32.mrf.mxu0
    %v1212 = vadd.f32 0.0, %v1211
    %1213 = vmatmul.f32.gmra.mxu0 %v1150
    %v1214 = vpop.f32.mrf.mxu0
    %v1215 = vadd.f32 0.0, %v1214
    %1216 = vmatmul.f32.gmra.mxu0 %v1153
    %v1217 = vpop.f32.mrf.mxu0
    %v1218 = vadd.f32 0.0, %v1217
    %1219 = vmatmul.f32.gmra.mxu0 %v1156
    %v1220 = vpop.f32.mrf.mxu0
    %v1221 = vadd.f32 0.0, %v1220
    %1222 = vmatmul.f32.gmra.mxu0 %v1159
    %v1223 = vpop.f32.mrf.mxu0
    %v1224 = vadd.f32 0.0, %v1223
    %1225 = vmatmul.f32.gmra.mxu0 %v1162
    %v1226 = vpop.f32.mrf.mxu0
    %v1227 = vadd.f32 0.0, %v1226
    %1228 = vdwg.mxu0
    %v1229 = vmul.f32 %v1182, %v794
    %v1230 = vmul.f32 %v1185, %v797
    %v1231 = vmul.f32 %v1188, %v800
    %v1232 = vmul.f32 %v1191, %v803
    %v1233 = vmul.f32 %v1194, %v806
    %v1234 = vmul.f32 %v1197, %v809
    %v1235 = vmul.f32 %v1200, %v812
    %v1236 = vmul.f32 %v1203, %v815
    %v1237 = vmul.f32 %v1206, %v818
    %v1238 = vmul.f32 %v1209, %v821
    %v1239 = vmul.f32 %v1212, %v824
    %v1240 = vmul.f32 %v1215, %v827
    %v1241 = vmul.f32 %v1218, %v830
    %v1242 = vmul.f32 %v1221, %v833
    %v1243 = vmul.f32 %v1224, %v836
    %v1244 = vmul.f32 %v1227, %v839
    %1245 = vmatpush.msra.mxu0 %v581
    %1246 = vmatpush.msra.mxu0 %v580
    %1247 = vmatpush.msra.mxu0 %v579
    %1248 = vmatpush.msra.mxu0 %v578
    %1249 = vmatpush.msra.mxu0 %v577
    %1250 = vmatpush.msra.mxu0 %v576
    %1251 = vmatpush.msra.mxu0 %v575
    %1252 = vmatpush.msra.mxu0 %v574
    %1253 = vmatpush.msra.mxu0 %v573
    %1254 = vmatpush.msra.mxu0 %v572
    %1255 = vmatpush.msra.mxu0 %v571
    %1256 = vmatpush.msra.mxu0 %v570
    %1257 = vmatpush.msra.mxu0 %v569
    %1258 = vmatpush.msra.mxu0 %v568
    %1259 = vmatpush.msra.mxu0 %v567
    %1260 = vmatpush.msra.mxu0 %v566
    %1261 = vmatmul.f32.gmra.mxu0 %v1229
    %v1262 = vpop.f32.mrf.mxu0
    %v1263 = vadd.f32 0.0, %v1262
    %1264 = vmatmul.f32.gmra.mxu0 %v1230
    %v1265 = vpop.f32.mrf.mxu0
    %v1266 = vadd.f32 0.0, %v1265
    %1267 = vmatmul.f32.gmra.mxu0 %v1231
    %v1268 = vpop.f32.mrf.mxu0
    %v1269 = vadd.f32 0.0, %v1268
    %1270 = vmatmul.f32.gmra.mxu0 %v1232
    %v1271 = vpop.f32.mrf.mxu0
    %v1272 = vadd.f32 0.0, %v1271
    %1273 = vmatmul.f32.gmra.mxu0 %v1233
    %v1274 = vpop.f32.mrf.mxu0
    %v1275 = vadd.f32 0.0, %v1274
    %1276 = vmatmul.f32.gmra.mxu0 %v1234
    %v1277 = vpop.f32.mrf.mxu0
    %v1278 = vadd.f32 0.0, %v1277
    %1279 = vmatmul.f32.gmra.mxu0 %v1235
    %v1280 = vpop.f32.mrf.mxu0
    %v1281 = vadd.f32 0.0, %v1280
    %1282 = vmatmul.f32.gmra.mxu0 %v1236
    %v1283 = vpop.f32.mrf.mxu0
    %v1284 = vadd.f32 0.0, %v1283
    %1285 = vmatmul.f32.gmra.mxu0 %v1237
    %v1286 = vpop.f32.mrf.mxu0
    %v1287 = vadd.f32 0.0, %v1286
    %1288 = vmatmul.f32.gmra.mxu0 %v1238
    %v1289 = vpop.f32.mrf.mxu0
    %v1290 = vadd.f32 0.0, %v1289
    %1291 = vmatmul.f32.gmra.mxu0 %v1239
    %v1292 = vpop.f32.mrf.mxu0
    %v1293 = vadd.f32 0.0, %v1292
    %1294 = vmatmul.f32.gmra.mxu0 %v1240
    %v1295 = vpop.f32.mrf.mxu0
    %v1296 = vadd.f32 0.0, %v1295
    %1297 = vmatmul.f32.gmra.mxu0 %v1241
    %v1298 = vpop.f32.mrf.mxu0
    %v1299 = vadd.f32 0.0, %v1298
    %1300 = vmatmul.f32.gmra.mxu0 %v1242
    %v1301 = vpop.f32.mrf.mxu0
    %v1302 = vadd.f32 0.0, %v1301
    %1303 = vmatmul.f32.gmra.mxu0 %v1243
    %v1304 = vpop.f32.mrf.mxu0
    %v1305 = vadd.f32 0.0, %v1304
    %1306 = vmatmul.f32.gmra.mxu0 %v1244
    %v1307 = vpop.f32.mrf.mxu0
    %v1308 = vadd.f32 0.0, %v1307
    %1309 = vdwg.mxu0
    %v1310 = vmul.f32 %v1263, %v534
    %v1311 = vmul.f32 %v1266, %v535
    %v1312 = vmul.f32 %v1269, %v536
    %v1313 = vmul.f32 %v1272, %v537
    %v1314 = vmul.f32 %v1275, %v538
    %v1315 = vmul.f32 %v1278, %v539
    %v1316 = vmul.f32 %v1281, %v540
    %v1317 = vmul.f32 %v1284, %v541
    %v1318 = vmul.f32 %v1287, %v542
    %v1319 = vmul.f32 %v1290, %v543
    %v1320 = vmul.f32 %v1293, %v544
    %v1321 = vmul.f32 %v1296, %v545
    %v1322 = vmul.f32 %v1299, %v546
    %v1323 = vmul.f32 %v1302, %v547
    %v1324 = vmul.f32 %v1305, %v548
    %v1325 = vmul.f32 %v1308, %v549
    %v1326 = vld [vmem:[#allocation14] sm:$0xff]
    %v1327 = vld [vmem:[#allocation14 + $0x8] sm:$0xff]
    %1328 = vmatpush.msra.mxu0 %v1325
    %1329 = vmatpush.msra.mxu0 %v1324
    %1330 = vmatpush.msra.mxu0 %v1323
    %1331 = vmatpush.msra.mxu0 %v1322
    %1332 = vmatpush.msra.mxu0 %v1321
    %1333 = vmatpush.msra.mxu0 %v1320
    %1334 = vmatpush.msra.mxu0 %v1319
    %1335 = vmatpush.msra.mxu0 %v1318
    %1336 = vmatpush.msra.mxu0 %v1317
    %1337 = vmatpush.msra.mxu0 %v1316
    %1338 = vmatpush.msra.mxu0 %v1315
    %1339 = vmatpush.msra.mxu0 %v1314
    %1340 = vmatpush.msra.mxu0 %v1313
    %1341 = vmatpush.msra.mxu0 %v1312
    %1342 = vmatpush.msra.mxu0 %v1311
    %1343 = vmatpush.msra.mxu0 %v1310
    %1344 = vmatmul.f32.gmra.mxu0 %v1326
    %v1345 = vpop.f32.mrf.mxu0
    %v1346 = vadd.f32 0.0, %v1345
    %1347 = vmatmul.f32.gmra.mxu0 %v1327
    %v1348 = vpop.f32.mrf.mxu0
    %v1349 = vadd.f32 0.0, %v1348
    %1350 = vdwg.mxu0
    %v1351 = vld [vmem:[%s15] sm:$0xff]
    %v1352 = vld [vmem:[%s15 + $0x8] sm:$0xff]
    %v1353 = vld [vmem:[%s15 + $0x10] sm:$0xff]
    %v1354 = vld [vmem:[%s15 + $0x18] sm:$0xff]
    %v1355 = vld [vmem:[%s15 + $0x20] sm:$0xff]
    %v1356 = vld [vmem:[%s15 + $0x28] sm:$0xff]
    %v1357 = vld [vmem:[%s15 + $0x30] sm:$0xff]
    %v1358 = vld [vmem:[%s15 + $0x38] sm:$0xff]
    %v1359 = vld [vmem:[%s15 + $0x40] sm:$0xff]
    %v1360 = vld [vmem:[%s15 + $0x48] sm:$0xff]
    %v1361 = vld [vmem:[%s15 + $0x50] sm:$0xff]
    %v1362 = vld [vmem:[%s15 + $0x58] sm:$0xff]
    %v1363 = vld [vmem:[%s15 + $0x60] sm:$0xff]
    %v1364 = vld [vmem:[%s15 + $0x68] sm:$0xff]
    %v1365 = vld [vmem:[%s15 + $0x70] sm:$0xff]
    %v1366 = vld [vmem:[%s15 + $0x78] sm:$0xff]
    %1367 = vmatpush.msra.mxu0 %v1366
    %1368 = vmatpush.msra.mxu0 %v1365
    %1369 = vmatpush.msra.mxu0 %v1364
    %1370 = vmatpush.msra.mxu0 %v1363
    %1371 = vmatpush.msra.mxu0 %v1362
    %1372 = vmatpush.msra.mxu0 %v1361
    %1373 = vmatpush.msra.mxu0 %v1360
    %1374 = vmatpush.msra.mxu0 %v1359
    %1375 = vmatpush.msra.mxu0 %v1358
    %1376 = vmatpush.msra.mxu0 %v1357
    %1377 = vmatpush.msra.mxu0 %v1356
    %1378 = vmatpush.msra.mxu0 %v1355
    %1379 = vmatpush.msra.mxu0 %v1354
    %1380 = vmatpush.msra.mxu0 %v1353
    %1381 = vmatpush.msra.mxu0 %v1352
    %1382 = vmatpush.msra.mxu0 %v1351
    %1383 = vmatmul.f32.gmra.mxu0 %v1346
    %v1384 = vpop.f32.mrf.mxu0
    %v1385 = vadd.f32 0.0, %v1384
    %1386 = vmatmul.f32.gmra.mxu0 %v1349
    %v1387 = vpop.f32.mrf.mxu0
    %v1388 = vadd.f32 0.0, %v1387
    %1389 = vdwg.mxu0
    %v1390 = vadd.f32 %v212, %v1385
    %v1391 = vadd.f32 %v213, %v1388
    %v1392 = vld [vmem:[#allocation5] sm:$0x1]
    %v1394 = vperm.slane %v1392, 0
    %v1396 = vmul.f32 %v1394, %v1390
    %v1397 = vmul.f32 %v1394, %v1391
    %v1398 = vmul.f32 %v1390, %v1390
    %v1399 = vmul.f32 %v1391, %v1391
    %1400 = vadd.xlane.f32.xlu0 %v1398
    %v1401 = vpop.xlane.xlu0 %1400
    %1402 = vadd.xlane.f32.xlu0 %v1399
    %v1403 = vpop.xlane.xlu0 %1402
    %v1404 = vmul.f32 %v1401, %v232
    %v1405 = vmul.f32 %v1403, %v232
    %v1406 = vadd.f32 %v1404, 1e-05
    %v1407 = vadd.f32 %v1405, 1e-05
    %v1408 = vrsqrt.pop %v1406
    %v1409 = vmul.f32 %v1408, %v1406
    %v1410 = vmul.f32 %v1409, %v1408
    %v1411 = vmul.f32 0.5, %v1410
    %v1412 = vsub.f32 1.5, %v1411
    %v1413 = vmul.f32 %v1408, %v1412
    %vm1414 = vweird.f32 %v1406
    %vm1415 = vweird.f32 %v1408
    %vm1416 = vmor %vm1414, %vm1415
    %v1417 = vsel %vm1416, %v1408, %v1413
    %v1418 = vrsqrt.pop %v1407
    %v1419 = vmul.f32 %v1418, %v1407
    %v1420 = vmul.f32 %v1419, %v1418
    %v1421 = vmul.f32 0.5, %v1420
    %v1422 = vsub.f32 1.5, %v1421
    %v1423 = vmul.f32 %v1418, %v1422
    %vm1424 = vweird.f32 %v1407
    %vm1425 = vweird.f32 %v1418
    %vm1426 = vmor %vm1424, %vm1425
    %v1427 = vsel %vm1426, %v1418, %v1423
    %v1428 = vmul.f32 %v1396, %v1417
    %v1429 = vmul.f32 %v1397, %v1427
    %v1430 = vld [vmem:[#allocation16] sm:$0xff]
    %v1431 = vld [vmem:[#allocation16 + $0x8] sm:$0xff]
    %v1432 = vld [vmem:[#allocation16 + $0x10] sm:$0xff]
    %v1433 = vld [vmem:[#allocation16 + $0x18] sm:$0xff]
    %v1434 = vld [vmem:[#allocation16 + $0x20] sm:$0xff]
    %v1435 = vld [vmem:[#allocation16 + $0x28] sm:$0xff]
    %v1436 = vld [vmem:[#allocation16 + $0x30] sm:$0xff]
    %v1437 = vld [vmem:[#allocation16 + $0x38] sm:$0xff]
    %v1438 = vld [vmem:[#allocation16 + $0x40] sm:$0xff]
    %v1439 = vld [vmem:[#allocation16 + $0x48] sm:$0xff]
    %v1440 = vld [vmem:[#allocation16 + $0x50] sm:$0xff]
    %v1441 = vld [vmem:[#allocation16 + $0x58] sm:$0xff]
    %v1442 = vld [vmem:[#allocation16 + $0x60] sm:$0xff]
    %v1443 = vld [vmem:[#allocation16 + $0x68] sm:$0xff]
    %v1444 = vld [vmem:[#allocation16 + $0x70] sm:$0xff]
    %v1445 = vld [vmem:[#allocation16 + $0x78] sm:$0xff]
    %v1446 = vld [vmem:[#allocation16 + $0x80] sm:$0xff]
    %v1447 = vld [vmem:[#allocation16 + $0x88] sm:$0xff]
    %v1448 = vld [vmem:[#allocation16 + $0x90] sm:$0xff]
    %v1449 = vld [vmem:[#allocation16 + $0x98] sm:$0xff]
    %v1450 = vld [vmem:[#allocation16 + $0xa0] sm:$0xff]
    %v1451 = vld [vmem:[#allocation16 + $0xa8] sm:$0xff]
    %v1452 = vld [vmem:[#allocation16 + $0xb0] sm:$0xff]
    %v1453 = vld [vmem:[#allocation16 + $0xb8] sm:$0xff]
    %v1454 = vld [vmem:[#allocation16 + $0xc0] sm:$0xff]
    %v1455 = vld [vmem:[#allocation16 + $0xc8] sm:$0xff]
    %v1456 = vld [vmem:[#allocation16 + $0xd0] sm:$0xff]
    %v1457 = vld [vmem:[#allocation16 + $0xd8] sm:$0xff]
    %v1458 = vld [vmem:[#allocation16 + $0xe0] sm:$0xff]
    %v1459 = vld [vmem:[#allocation16 + $0xe8] sm:$0xff]
    %v1460 = vld [vmem:[#allocation16 + $0xf0] sm:$0xff]
    %v1461 = vld [vmem:[#allocation16 + $0xf8] sm:$0xff]
    %v1462 = vld [vmem:[#allocation16 + $0x100] sm:$0xff]
    %v1463 = vld [vmem:[#allocation16 + $0x108] sm:$0xff]
    %v1464 = vld [vmem:[#allocation16 + $0x110] sm:$0xff]
    %v1465 = vld [vmem:[#allocation16 + $0x118] sm:$0xff]
    %v1466 = vld [vmem:[#allocation16 + $0x120] sm:$0xff]
    %v1467 = vld [vmem:[#allocation16 + $0x128] sm:$0xff]
    %v1468 = vld [vmem:[#allocation16 + $0x130] sm:$0xff]
    %v1469 = vld [vmem:[#allocation16 + $0x138] sm:$0xff]
    %v1470 = vld [vmem:[#allocation16 + $0x140] sm:$0xff]
    %v1471 = vld [vmem:[#allocation16 + $0x148] sm:$0xff]
    %v1472 = vld [vmem:[#allocation16 + $0x150] sm:$0xff]
    %v1473 = vld [vmem:[#allocation16 + $0x158] sm:$0xff]
    %v1474 = vld [vmem:[#allocation16 + $0x160] sm:$0xff]
    %v1475 = vld [vmem:[#allocation16 + $0x168] sm:$0xff]
    %v1476 = vld [vmem:[#allocation16 + $0x170] sm:$0xff]
    %v1477 = vld [vmem:[#allocation16 + $0x178] sm:$0xff]
    %v1478 = vld [vmem:[#allocation16 + $0x180] sm:$0xff]
    %v1479 = vld [vmem:[#allocation16 + $0x188] sm:$0xff]
    %v1480 = vld [vmem:[#allocation16 + $0x190] sm:$0xff]
    %v1481 = vld [vmem:[#allocation16 + $0x198] sm:$0xff]
    %v1482 = vld [vmem:[#allocation16 + $0x1a0] sm:$0xff]
    %v1483 = vld [vmem:[#allocation16 + $0x1a8] sm:$0xff]
    %v1484 = vld [vmem:[#allocation16 + $0x1b0] sm:$0xff]
    %v1485 = vld [vmem:[#allocation16 + $0x1b8] sm:$0xff]
    %v1486 = vld [vmem:[#allocation16 + $0x1c0] sm:$0xff]
    %v1487 = vld [vmem:[#allocation16 + $0x1c8] sm:$0xff]
    %v1488 = vld [vmem:[#allocation16 + $0x1d0] sm:$0xff]
    %v1489 = vld [vmem:[#allocation16 + $0x1d8] sm:$0xff]
    %v1490 = vld [vmem:[#allocation16 + $0x1e0] sm:$0xff]
    %v1491 = vld [vmem:[#allocation16 + $0x1e8] sm:$0xff]
    %v1492 = vld [vmem:[#allocation16 + $0x1f0] sm:$0xff]
    %v1493 = vld [vmem:[#allocation16 + $0x1f8] sm:$0xff]
    %v1494 = vld [vmem:[#allocation16 + $0x200] sm:$0xff]
    %v1495 = vld [vmem:[#allocation16 + $0x208] sm:$0xff]
    %v1496 = vld [vmem:[#allocation16 + $0x210] sm:$0xff]
    %v1497 = vld [vmem:[#allocation16 + $0x218] sm:$0xff]
    %v1498 = vld [vmem:[#allocation16 + $0x220] sm:$0xff]
    %v1499 = vld [vmem:[#allocation16 + $0x228] sm:$0xff]
    %v1500 = vld [vmem:[#allocation16 + $0x230] sm:$0xff]
    %v1501 = vld [vmem:[#allocation16 + $0x238] sm:$0xff]
    %v1502 = vld [vmem:[#allocation16 + $0x240] sm:$0xff]
    %v1503 = vld [vmem:[#allocation16 + $0x248] sm:$0xff]
    %v1504 = vld [vmem:[#allocation16 + $0x250] sm:$0xff]
    %v1505 = vld [vmem:[#allocation16 + $0x258] sm:$0xff]
    %v1506 = vld [vmem:[#allocation16 + $0x260] sm:$0xff]
    %v1507 = vld [vmem:[#allocation16 + $0x268] sm:$0xff]
    %v1508 = vld [vmem:[#allocation16 + $0x270] sm:$0xff]
    %v1509 = vld [vmem:[#allocation16 + $0x278] sm:$0xff]
    %v1510 = vld [vmem:[#allocation16 + $0x280] sm:$0xff]
    %v1511 = vld [vmem:[#allocation16 + $0x288] sm:$0xff]
    %v1512 = vld [vmem:[#allocation16 + $0x290] sm:$0xff]
    %v1513 = vld [vmem:[#allocation16 + $0x298] sm:$0xff]
    %v1514 = vld [vmem:[#allocation16 + $0x2a0] sm:$0xff]
    %v1515 = vld [vmem:[#allocation16 + $0x2a8] sm:$0xff]
    %v1516 = vld [vmem:[#allocation16 + $0x2b0] sm:$0xff]
    %v1517 = vld [vmem:[#allocation16 + $0x2b8] sm:$0xff]
    %v1518 = vld [vmem:[#allocation16 + $0x2c0] sm:$0xff]
    %v1519 = vld [vmem:[#allocation16 + $0x2c8] sm:$0xff]
    %v1520 = vld [vmem:[#allocation16 + $0x2d0] sm:$0xff]
    %v1521 = vld [vmem:[#allocation16 + $0x2d8] sm:$0xff]
    %v1522 = vld [vmem:[#allocation16 + $0x2e0] sm:$0xff]
    %v1523 = vld [vmem:[#allocation16 + $0x2e8] sm:$0xff]
    %v1524 = vld [vmem:[#allocation16 + $0x2f0] sm:$0xff]
    %v1525 = vld [vmem:[#allocation16 + $0x2f8] sm:$0xff]
    %1526 = vmatpush.msra.mxu0 %v1520
    %1527 = vmatpush.msra.mxu0 %v1514
    %1528 = vmatpush.msra.mxu0 %v1508
    %1529 = vmatpush.msra.mxu0 %v1502
    %1530 = vmatpush.msra.mxu0 %v1496
    %1531 = vmatpush.msra.mxu0 %v1490
    %1532 = vmatpush.msra.mxu0 %v1484
    %1533 = vmatpush.msra.mxu0 %v1478
    %1534 = vmatpush.msra.mxu0 %v1472
    %1535 = vmatpush.msra.mxu0 %v1466
    %1536 = vmatpush.msra.mxu0 %v1460
    %1537 = vmatpush.msra.mxu0 %v1454
    %1538 = vmatpush.msra.mxu0 %v1448
    %1539 = vmatpush.msra.mxu0 %v1442
    %1540 = vmatpush.msra.mxu0 %v1436
    %1541 = vmatpush.msra.mxu0 %v1430
    %1542 = vmatmul.f32.gmra.mxu0 %v1428
    %v1543 = vpop.f32.mrf.mxu0
    %v1544 = vadd.f32 0.0, %v1543
    %1545 = vmatmul.f32.gmra.mxu0 %v1429
    %v1546 = vpop.f32.mrf.mxu0
    %v1547 = vadd.f32 0.0, %v1546
    %1548 = vdwg.mxu0
    %1549 = vmatpush.msra.mxu0 %v1521
    %1550 = vmatpush.msra.mxu0 %v1515
    %1551 = vmatpush.msra.mxu0 %v1509
    %1552 = vmatpush.msra.mxu0 %v1503
    %1553 = vmatpush.msra.mxu0 %v1497
    %1554 = vmatpush.msra.mxu0 %v1491
    %1555 = vmatpush.msra.mxu0 %v1485
    %1556 = vmatpush.msra.mxu0 %v1479
    %1557 = vmatpush.msra.mxu0 %v1473
    %1558 = vmatpush.msra.mxu0 %v1467
    %1559 = vmatpush.msra.mxu0 %v1461
    %1560 = vmatpush.msra.mxu0 %v1455
    %1561 = vmatpush.msra.mxu0 %v1449
    %1562 = vmatpush.msra.mxu0 %v1443
    %1563 = vmatpush.msra.mxu0 %v1437
    %1564 = vmatpush.msra.mxu0 %v1431
    %1565 = vmatmul.f32.gmra.mxu0 %v1428
    %v1566 = vpop.f32.mrf.mxu0
    %v1567 = vadd.f32 0.0, %v1566
    %1568 = vmatmul.f32.gmra.mxu0 %v1429
    %v1569 = vpop.f32.mrf.mxu0
    %v1570 = vadd.f32 0.0, %v1569
    %1571 = vdwg.mxu0
    %1572 = vmatpush.msra.mxu0 %v1522
    %1573 = vmatpush.msra.mxu0 %v1516
    %1574 = vmatpush.msra.mxu0 %v1510
    %1575 = vmatpush.msra.mxu0 %v1504
    %1576 = vmatpush.msra.mxu0 %v1498
    %1577 = vmatpush.msra.mxu0 %v1492
    %1578 = vmatpush.msra.mxu0 %v1486
    %1579 = vmatpush.msra.mxu0 %v1480
    %1580 = vmatpush.msra.mxu0 %v1474
    %1581 = vmatpush.msra.mxu0 %v1468
    %1582 = vmatpush.msra.mxu0 %v1462
    %1583 = vmatpush.msra.mxu0 %v1456
    %1584 = vmatpush.msra.mxu0 %v1450
    %1585 = vmatpush.msra.mxu0 %v1444
    %1586 = vmatpush.msra.mxu0 %v1438
    %1587 = vmatpush.msra.mxu0 %v1432
    %1588 = vmatmul.f32.gmra.mxu0 %v1428
    %v1589 = vpop.f32.mrf.mxu0
    %v1590 = vadd.f32 0.0, %v1589
    %1591 = vmatmul.f32.gmra.mxu0 %v1429
    %v1592 = vpop.f32.mrf.mxu0
    %v1593 = vadd.f32 0.0, %v1592
    %1594 = vdwg.mxu0
    %1595 = vmatpush.msra.mxu0 %v1523
    %1596 = vmatpush.msra.mxu0 %v1517
    %1597 = vmatpush.msra.mxu0 %v1511
    %1598 = vmatpush.msra.mxu0 %v1505
    %1599 = vmatpush.msra.mxu0 %v1499
    %1600 = vmatpush.msra.mxu0 %v1493
    %1601 = vmatpush.msra.mxu0 %v1487
    %1602 = vmatpush.msra.mxu0 %v1481
    %1603 = vmatpush.msra.mxu0 %v1475
    %1604 = vmatpush.msra.mxu0 %v1469
    %1605 = vmatpush.msra.mxu0 %v1463
    %1606 = vmatpush.msra.mxu0 %v1457
    %1607 = vmatpush.msra.mxu0 %v1451
    %1608 = vmatpush.msra.mxu0 %v1445
    %1609 = vmatpush.msra.mxu0 %v1439
    %1610 = vmatpush.msra.mxu0 %v1433
    %1611 = vmatmul.f32.gmra.mxu0 %v1428
    %v1612 = vpop.f32.mrf.mxu0
    %v1613 = vadd.f32 0.0, %v1612
    %1614 = vmatmul.f32.gmra.mxu0 %v1429
    %v1615 = vpop.f32.mrf.mxu0
    %v1616 = vadd.f32 0.0, %v1615
    %1617 = vdwg.mxu0
    %1618 = vmatpush.msra.mxu0 %v1524
    %1619 = vmatpush.msra.mxu0 %v1518
    %1620 = vmatpush.msra.mxu0 %v1512
    %1621 = vmatpush.msra.mxu0 %v1506
    %1622 = vmatpush.msra.mxu0 %v1500
    %1623 = vmatpush.msra.mxu0 %v1494
    %1624 = vmatpush.msra.mxu0 %v1488
    %1625 = vmatpush.msra.mxu0 %v1482
    %1626 = vmatpush.msra.mxu0 %v1476
    %1627 = vmatpush.msra.mxu0 %v1470
    %1628 = vmatpush.msra.mxu0 %v1464
    %1629 = vmatpush.msra.mxu0 %v1458
    %1630 = vmatpush.msra.mxu0 %v1452
    %1631 = vmatpush.msra.mxu0 %v1446
    %1632 = vmatpush.msra.mxu0 %v1440
    %1633 = vmatpush.msra.mxu0 %v1434
    %1634 = vmatmul.f32.gmra.mxu0 %v1428
    %v1635 = vpop.f32.mrf.mxu0
    %v1636 = vadd.f32 0.0, %v1635
    %1637 = vmatmul.f32.gmra.mxu0 %v1429
    %v1638 = vpop.f32.mrf.mxu0
    %v1639 = vadd.f32 0.0, %v1638
    %1640 = vdwg.mxu0
    %1641 = vmatpush.msra.mxu0 %v1525
    %1642 = vmatpush.msra.mxu0 %v1519
    %1643 = vmatpush.msra.mxu0 %v1513
    %1644 = vmatpush.msra.mxu0 %v1507
    %1645 = vmatpush.msra.mxu0 %v1501
    %1646 = vmatpush.msra.mxu0 %v1495
    %1647 = vmatpush.msra.mxu0 %v1489
    %1648 = vmatpush.msra.mxu0 %v1483
    %1649 = vmatpush.msra.mxu0 %v1477
    %1650 = vmatpush.msra.mxu0 %v1471
    %1651 = vmatpush.msra.mxu0 %v1465
    %1652 = vmatpush.msra.mxu0 %v1459
    %1653 = vmatpush.msra.mxu0 %v1453
    %1654 = vmatpush.msra.mxu0 %v1447
    %1655 = vmatpush.msra.mxu0 %v1441
    %1656 = vmatpush.msra.mxu0 %v1435
    %1657 = vmatmul.f32.gmra.mxu0 %v1428
    %v1658 = vpop.f32.mrf.mxu0
    %v1659 = vadd.f32 0.0, %v1658
    %1660 = vmatmul.f32.gmra.mxu0 %v1429
    %v1661 = vpop.f32.mrf.mxu0
    %v1662 = vadd.f32 0.0, %v1661
    %1663 = vdwg.mxu0
    %v1664 = vxor.u32 %v1544, 2147483648
    %v1665 = vxor.u32 %v1567, 2147483648
    %v1666 = vxor.u32 %v1590, 2147483648
    %v1667 = vxor.u32 %v1547, 2147483648
    %v1668 = vxor.u32 %v1570, 2147483648
    %v1669 = vxor.u32 %v1593, 2147483648
    %v1670 = vmul.f32 %v1664, 1.442695
    %v1671 = vpow.pop %v1670
    %v1672 = vmul.f32 %v1665, 1.442695
    %v1673 = vpow.pop %v1672
    %v1674 = vmul.f32 %v1666, 1.442695
    %v1675 = vpow.pop %v1674
    %v1676 = vmul.f32 %v1667, 1.442695
    %v1677 = vpow.pop %v1676
    %v1678 = vmul.f32 %v1668, 1.442695
    %v1679 = vpow.pop %v1678
    %v1680 = vmul.f32 %v1669, 1.442695
    %v1681 = vpow.pop %v1680
    %v1682 = vadd.f32 %v1671, 1.0
    %v1683 = vadd.f32 %v1673, 1.0
    %v1684 = vadd.f32 %v1675, 1.0
    %v1685 = vadd.f32 %v1677, 1.0
    %v1686 = vadd.f32 %v1679, 1.0
    %v1687 = vadd.f32 %v1681, 1.0
    %v1688 = vrcp.pop %v1682
    %v1689 = vmul.f32 %v1682, %v1688
    %v1690 = vsub.f32 1.0, %v1689
    %v1691 = vmul.f32 %v1688, %v1690
    %v1692 = vadd.f32 %v1688, %v1691
    %vm1693 = vweird.f32 %v1682
    %vm1694 = vweird.f32 %v1688
    %vm1695 = vmor %vm1693, %vm1694
    %v1696 = vsel %vm1695, %v1688, %v1692
    %v1697 = vand.u32 2147483647, %v1682
    %vm1698 = vcmp.eq.f32.partialorder %v1697, 8.507059e+37
    %v1699 = vand.u32 %v1682, 2147483648
    %v1700 = vor.u32 1.1754944e-38, %v1699
    %v1701 = vsel %vm1698, %v1700, %v1696
    %v1702 = vmul.f32 1.0, %v1701
    %v1703 = vrcp.pop %v1683
    %v1704 = vmul.f32 %v1683, %v1703
    %v1705 = vsub.f32 1.0, %v1704
    %v1706 = vmul.f32 %v1703, %v1705
    %v1707 = vadd.f32 %v1703, %v1706
    %vm1708 = vweird.f32 %v1683
    %vm1709 = vweird.f32 %v1703
    %vm1710 = vmor %vm1708, %vm1709
    %v1711 = vsel %vm1710, %v1703, %v1707
    %v1712 = vand.u32 2147483647, %v1683
    %vm1713 = vcmp.eq.f32.partialorder %v1712, 8.507059e+37
    %v1714 = vand.u32 %v1683, 2147483648
    %v1715 = vor.u32 1.1754944e-38, %v1714
    %v1716 = vsel %vm1713, %v1715, %v1711
    %v1717 = vmul.f32 1.0, %v1716
    %v1718 = vrcp.pop %v1684
    %v1719 = vmul.f32 %v1684, %v1718
    %v1720 = vsub.f32 1.0, %v1719
    %v1721 = vmul.f32 %v1718, %v1720
    %v1722 = vadd.f32 %v1718, %v1721
    %vm1723 = vweird.f32 %v1684
    %vm1724 = vweird.f32 %v1718
    %vm1725 = vmor %vm1723, %vm1724
    %v1726 = vsel %vm1725, %v1718, %v1722
    %v1727 = vand.u32 2147483647, %v1684
    %vm1728 = vcmp.eq.f32.partialorder %v1727, 8.507059e+37
    %v1729 = vand.u32 %v1684, 2147483648
    %v1730 = vor.u32 1.1754944e-38, %v1729
    %v1731 = vsel %vm1728, %v1730, %v1726
    %v1732 = vmul.f32 1.0, %v1731
    %v1733 = vrcp.pop %v1685
    %v1734 = vmul.f32 %v1685, %v1733
    %v1735 = vsub.f32 1.0, %v1734
    %v1736 = vmul.f32 %v1733, %v1735
    %v1737 = vadd.f32 %v1733, %v1736
    %vm1738 = vweird.f32 %v1685
    %vm1739 = vweird.f32 %v1733
    %vm1740 = vmor %vm1738, %vm1739
    %v1741 = vsel %vm1740, %v1733, %v1737
    %v1742 = vand.u32 2147483647, %v1685
    %vm1743 = vcmp.eq.f32.partialorder %v1742, 8.507059e+37
    %v1744 = vand.u32 %v1685, 2147483648
    %v1745 = vor.u32 1.1754944e-38, %v1744
    %v1746 = vsel %vm1743, %v1745, %v1741
    %v1747 = vmul.f32 1.0, %v1746
    %v1748 = vrcp.pop %v1686
    %v1749 = vmul.f32 %v1686, %v1748
    %v1750 = vsub.f32 1.0, %v1749
    %v1751 = vmul.f32 %v1748, %v1750
    %v1752 = vadd.f32 %v1748, %v1751
    %vm1753 = vweird.f32 %v1686
    %vm1754 = vweird.f32 %v1748
    %vm1755 = vmor %vm1753, %vm1754
    %v1756 = vsel %vm1755, %v1748, %v1752
    %v1757 = vand.u32 2147483647, %v1686
    %vm1758 = vcmp.eq.f32.partialorder %v1757, 8.507059e+37
    %v1759 = vand.u32 %v1686, 2147483648
    %v1760 = vor.u32 1.1754944e-38, %v1759
    %v1761 = vsel %vm1758, %v1760, %v1756
    %v1762 = vmul.f32 1.0, %v1761
    %v1763 = vrcp.pop %v1687
    %v1764 = vmul.f32 %v1687, %v1763
    %v1765 = vsub.f32 1.0, %v1764
    %v1766 = vmul.f32 %v1763, %v1765
    %v1767 = vadd.f32 %v1763, %v1766
    %vm1768 = vweird.f32 %v1687
    %vm1769 = vweird.f32 %v1763
    %vm1770 = vmor %vm1768, %vm1769
    %v1771 = vsel %vm1770, %v1763, %v1767
    %v1772 = vand.u32 2147483647, %v1687
    %vm1773 = vcmp.eq.f32.partialorder %v1772, 8.507059e+37
    %v1774 = vand.u32 %v1687, 2147483648
    %v1775 = vor.u32 1.1754944e-38, %v1774
    %v1776 = vsel %vm1773, %v1775, %v1771
    %v1777 = vmul.f32 1.0, %v1776
    %v1778 = vmul.f32 %v1544, %v1702
    %v1779 = vmul.f32 %v1567, %v1717
    %v1780 = vmul.f32 %v1590, %v1732
    %v1781 = vmul.f32 %v1547, %v1747
    %v1782 = vmul.f32 %v1570, %v1762
    %v1783 = vmul.f32 %v1593, %v1777
    %v1784 = vmul.f32 %v1778, %v1613
    %v1785 = vmul.f32 %v1779, %v1636
    %v1786 = vmul.f32 %v1780, %v1659
    %v1787 = vmul.f32 %v1781, %v1616
    %v1788 = vmul.f32 %v1782, %v1639
    %v1789 = vmul.f32 %v1783, %v1662
    %v1790 = vld [vmem:[#allocation17] sm:$0xff]
    %v1791 = vld [vmem:[#allocation17 + $0x8] sm:$0xff]
    %v1792 = vld [vmem:[#allocation17 + $0x10] sm:$0xff]
    %v1793 = vld [vmem:[#allocation17 + $0x18] sm:$0xff]
    %v1794 = vld [vmem:[#allocation17 + $0x20] sm:$0xff]
    %v1795 = vld [vmem:[#allocation17 + $0x28] sm:$0xff]
    %v1796 = vld [vmem:[#allocation17 + $0x30] sm:$0xff]
    %v1797 = vld [vmem:[#allocation17 + $0x38] sm:$0xff]
    %v1798 = vld [vmem:[#allocation17 + $0x40] sm:$0xff]
    %v1799 = vld [vmem:[#allocation17 + $0x48] sm:$0xff]
    %v1800 = vld [vmem:[#allocation17 + $0x50] sm:$0xff]
    %v1801 = vld [vmem:[#allocation17 + $0x58] sm:$0xff]
    %v1802 = vld [vmem:[#allocation17 + $0x60] sm:$0xff]
    %v1803 = vld [vmem:[#allocation17 + $0x68] sm:$0xff]
    %v1804 = vld [vmem:[#allocation17 + $0x70] sm:$0xff]
    %v1805 = vld [vmem:[#allocation17 + $0x78] sm:$0xff]
    %v1806 = vld [vmem:[#allocation17 + $0x80] sm:$0xff]
    %v1807 = vld [vmem:[#allocation17 + $0x88] sm:$0xff]
    %v1808 = vld [vmem:[#allocation17 + $0x90] sm:$0xff]
    %v1809 = vld [vmem:[#allocation17 + $0x98] sm:$0xff]
    %v1810 = vld [vmem:[#allocation17 + $0xa0] sm:$0xff]
    %v1811 = vld [vmem:[#allocation17 + $0xa8] sm:$0xff]
    %v1812 = vld [vmem:[#allocation17 + $0xb0] sm:$0xff]
    %v1813 = vld [vmem:[#allocation17 + $0xb8] sm:$0xff]
    %v1814 = vld [vmem:[#allocation17 + $0xc0] sm:$0xff]
    %v1815 = vld [vmem:[#allocation17 + $0xc8] sm:$0xff]
    %v1816 = vld [vmem:[#allocation17 + $0xd0] sm:$0xff]
    %v1817 = vld [vmem:[#allocation17 + $0xd8] sm:$0xff]
    %v1818 = vld [vmem:[#allocation17 + $0xe0] sm:$0xff]
    %v1819 = vld [vmem:[#allocation17 + $0xe8] sm:$0xff]
    %v1820 = vld [vmem:[#allocation17 + $0xf0] sm:$0xff]
    %v1821 = vld [vmem:[#allocation17 + $0xf8] sm:$0xff]
    %v1822 = vld [vmem:[#allocation17 + $0x100] sm:$0xff]
    %v1823 = vld [vmem:[#allocation17 + $0x108] sm:$0xff]
    %v1824 = vld [vmem:[#allocation17 + $0x110] sm:$0xff]
    %v1825 = vld [vmem:[#allocation17 + $0x118] sm:$0xff]
    %v1826 = vld [vmem:[#allocation17 + $0x120] sm:$0xff]
    %v1827 = vld [vmem:[#allocation17 + $0x128] sm:$0xff]
    %v1828 = vld [vmem:[#allocation17 + $0x130] sm:$0xff]
    %v1829 = vld [vmem:[#allocation17 + $0x138] sm:$0xff]
    %v1830 = vld [vmem:[#allocation17 + $0x140] sm:$0xff]
    %v1831 = vld [vmem:[#allocation17 + $0x148] sm:$0xff]
    %v1832 = vld [vmem:[#allocation17 + $0x150] sm:$0xff]
    %v1833 = vld [vmem:[#allocation17 + $0x158] sm:$0xff]
    %v1834 = vld [vmem:[#allocation17 + $0x160] sm:$0xff]
    %v1835 = vld [vmem:[#allocation17 + $0x168] sm:$0xff]
    %v1836 = vld [vmem:[#allocation17 + $0x170] sm:$0xff]
    %v1837 = vld [vmem:[#allocation17 + $0x178] sm:$0xff]
    %1838 = vmatpush.msra.mxu0 %v1805
    %1839 = vmatpush.msra.mxu0 %v1804
    %1840 = vmatpush.msra.mxu0 %v1803
    %1841 = vmatpush.msra.mxu0 %v1802
    %1842 = vmatpush.msra.mxu0 %v1801
    %1843 = vmatpush.msra.mxu0 %v1800
    %1844 = vmatpush.msra.mxu0 %v1799
    %1845 = vmatpush.msra.mxu0 %v1798
    %1846 = vmatpush.msra.mxu0 %v1797
    %1847 = vmatpush.msra.mxu0 %v1796
    %1848 = vmatpush.msra.mxu0 %v1795
    %1849 = vmatpush.msra.mxu0 %v1794
    %1850 = vmatpush.msra.mxu0 %v1793
    %1851 = vmatpush.msra.mxu0 %v1792
    %1852 = vmatpush.msra.mxu0 %v1791
    %1853 = vmatpush.msra.mxu0 %v1790
    %1854 = vmatmul.f32.gmra.mxu0 %v1784
    %v1855 = vpop.f32.mrf.mxu0
    %v1856 = vadd.f32 0.0, %v1855
    %1857 = vmatmul.f32.gmra.mxu0 %v1787
    %v1858 = vpop.f32.mrf.mxu0
    %v1859 = vadd.f32 0.0, %v1858
    %1860 = vdwg.mxu0
    %1861 = vmatpush.msra.mxu0 %v1821
    %1862 = vmatpush.msra.mxu0 %v1820
    %1863 = vmatpush.msra.mxu0 %v1819
    %1864 = vmatpush.msra.mxu0 %v1818
    %1865 = vmatpush.msra.mxu0 %v1817
    %1866 = vmatpush.msra.mxu0 %v1816
    %1867 = vmatpush.msra.mxu0 %v1815
    %1868 = vmatpush.msra.mxu0 %v1814
    %1869 = vmatpush.msra.mxu0 %v1813
    %1870 = vmatpush.msra.mxu0 %v1812
    %1871 = vmatpush.msra.mxu0 %v1811
    %1872 = vmatpush.msra.mxu0 %v1810
    %1873 = vmatpush.msra.mxu0 %v1809
    %1874 = vmatpush.msra.mxu0 %v1808
    %1875 = vmatpush.msra.mxu0 %v1807
    %1876 = vmatpush.msra.mxu0 %v1806
    %1877 = vmatmul.f32.gmra.mxu0 %v1785
    %v1878 = vpop.f32.mrf.mxu0
    %v1879 = vadd.f32 %v1856, %v1878
    %1880 = vmatmul.f32.gmra.mxu0 %v1788
    %v1881 = vpop.f32.mrf.mxu0
    %v1882 = vadd.f32 %v1859, %v1881
    %1883 = vdwg.mxu0
    %1884 = vmatpush.msra.mxu0 %v1837
    %1885 = vmatpush.msra.mxu0 %v1836
    %1886 = vmatpush.msra.mxu0 %v1835
    %1887 = vmatpush.msra.mxu0 %v1834
    %1888 = vmatpush.msra.mxu0 %v1833
    %1889 = vmatpush.msra.mxu0 %v1832
    %1890 = vmatpush.msra.mxu0 %v1831
    %1891 = vmatpush.msra.mxu0 %v1830
    %1892 = vmatpush.msra.mxu0 %v1829
    %1893 = vmatpush.msra.mxu0 %v1828
    %1894 = vmatpush.msra.mxu0 %v1827
    %1895 = vmatpush.msra.mxu0 %v1826
    %1896 = vmatpush.msra.mxu0 %v1825
    %1897 = vmatpush.msra.mxu0 %v1824
    %1898 = vmatpush.msra.mxu0 %v1823
    %1899 = vmatpush.msra.mxu0 %v1822
    %1900 = vmatmul.f32.gmra.mxu0 %v1786
    %v1901 = vpop.f32.mrf.mxu0
    %v1902 = vadd.f32 %v1879, %v1901
    %1903 = vmatmul.f32.gmra.mxu0 %v1789
    %v1904 = vpop.f32.mrf.mxu0
    %v1905 = vadd.f32 %v1882, %v1904
    %1906 = vdwg.mxu0
    %v1907 = vadd.f32 %v1390, %v1902
    %v1908 = vadd.f32 %v1391, %v1905
    %1909 = vst [vmem:[#allocation19] sm:$0xff] %v1907
    %1910 = vst [vmem:[#allocation19 + $0x8] sm:$0xff] %v1908
    // Predicated region
    $region114: #{transformer_block.1} parent=1 // pred_check
      _
    $region115: #{transformer_block.1} parent=1 // pred_check_branch
      %1912 = sbr.rel (0) target = $region117
    $region116: #{transformer_block.1} parent=1 // pred_region
      %1914 = vsyncadd [#allocation4], 0
      %s1915 = sshll.u32 [#allocation19], 4
      %s1916 = int_to_ptr.vmem [resolvable:$true] %s1915
      %s1917 = sshll.u32 %s18, 4
      %s1918 = int_to_ptr.hbm [resolvable:$true] %s1917
      %1923 = dma.vmem_to_hbm [thread:$0]  %s1916, 256, %s1918, [#allocation4], 128, 128, 8
    $region117: #{transformer_block.1} parent=1 // pred_fallthru
      _
    // Predicated region
    $region118: #{transformer_block.1} parent=1 // pred_check
      _
    $region119: #{transformer_block.1} parent=1 // pred_check_branch
      %1925 = sbr.rel (0) target = $region121
    $region120: #{transformer_block.1} parent=1 // pred_region
      %1927 = dma.done [#allocation4], 256
    $region121: #{transformer_block.1} parent=1 // pred_fallthru
      _
    %1928 = vsyncpa [#allocation3], 1
    %1929 = vsyncpa [#allocation6], 1
    %1930 = vsyncpa [#allocation9], 1
    %1931 = vsyncpa [#allocation12], 1
    %1932 = vsyncpa [#allocation15], 1
    %1933 = vsyncpa [#allocation18], 1
    %1934 = vsyncpa [#allocation4], 1

</llo_original>
